<compile_context>
chip_gen: v5e
topology: v5e:2x2
jax: 0.10.0
libtpu: 0.0.40
codegen_flags: <defaults>
</compile_context>

<pallas_src>
import math
import functools

import jax
import jax.numpy as jnp
from jax import lax
from jax.experimental import pallas as pl
from jax.experimental.pallas import tpu as pltpu


LN_EPS = 1e-5
NEG_INF = -1e9


def _layer_norm(v, g, b, eps):
    # PyTorch nn.LayerNorm semantics: biased variance, eps inside rsqrt.
    mean = jnp.mean(v, axis=-1, keepdims=True)
    var = jnp.mean((v - mean) ** 2, axis=-1, keepdims=True)
    return (v - mean) * lax.rsqrt(var + eps) * g + b


# ----------------------------------------------------------------------------
# Fused kernel: QKV proj -> all-heads attention -> out proj -> add&LN1 ->
#               FFN (fc2(relu(fc1))) -> add&LN2      (one batch per grid step)
# ----------------------------------------------------------------------------
def _encoder_layer_kernel(x_ref, wqkv_ref, bqkv_ref, wo_ref, bo_ref, mask_ref,
                          g1_ref, be1_ref, w1_ref, bf1_ref, w2_ref, bf2_ref,
                          g2_ref, be2_ref, o_ref, *, num_heads, scale, eps):
    x = x_ref[0]                                        # (S, D) f32
    S, D = x.shape
    dk = D // num_heads

    # ---- fused QKV projection: one (S, D) x (D, 3D) MXU matmul -------------
    qkv = (jnp.dot(x.astype(jnp.bfloat16), wqkv_ref[...],
                   preferred_element_type=jnp.float32) + bqkv_ref[...])

    mask = mask_ref[0]                                  # (S, S) additive f32

    # ---- multi-head attention (statically unrolled over heads) -------------
    ctx_parts = []
    for h in range(num_heads):
        lo = h * dk
        qh = qkv[:, lo:lo + dk].astype(jnp.bfloat16)
        kh = qkv[:, D + lo:D + lo + dk].astype(jnp.bfloat16)
        vh = qkv[:, 2 * D + lo:2 * D + lo + dk].astype(jnp.bfloat16)

        # Q @ K^T via dot_general contracting last dims (no explicit transpose)
        s = lax.dot_general(qh, kh, (((1,), (1,)), ((), ())),
                            preferred_element_type=jnp.float32) * scale
        s = s + mask                                    # 0 keep / -1e9 masked
        smax = jnp.max(s, axis=-1, keepdims=True)
        p = jnp.exp(s - smax)
        p = p * pl.reciprocal(jnp.sum(p, axis=-1, keepdims=True), approx=True)
        ctx_parts.append(jnp.dot(p.astype(jnp.bfloat16), vh,
                                 preferred_element_type=jnp.float32))
    ctx = jnp.concatenate(ctx_parts, axis=-1)           # (S, D), lane-dense

    attn_out = (jnp.dot(ctx.astype(jnp.bfloat16), wo_ref[...],
                        preferred_element_type=jnp.float32) + bo_ref[...])

    # ---- residual + LayerNorm 1 ---------------------------------------------
    x1 = _layer_norm(x + attn_out, g1_ref[...], be1_ref[...], eps)

    # ---- position-wise FFN ---------------------------------------------------
    h1 = (jnp.dot(x1.astype(jnp.bfloat16), w1_ref[...],
                  preferred_element_type=jnp.float32) + bf1_ref[...])
    h1 = jnp.maximum(h1, 0.0)
    ff = (jnp.dot(h1.astype(jnp.bfloat16), w2_ref[...],
                  preferred_element_type=jnp.float32) + bf2_ref[...])

    # ---- residual + LayerNorm 2 ---------------------------------------------
    o_ref[0] = _layer_norm(x1 + ff, g2_ref[...], be2_ref[...], eps)


# ----------------------------------------------------------------------------
# EncoderLayer forward (1 pallas_call total)
# ----------------------------------------------------------------------------
def encoder_layer(x, params, mask_add, num_heads, eps=LN_EPS):
    B, S, D = x.shape
    F = params["w1"].shape[1]
    dk = D // num_heads
    kern = functools.partial(_encoder_layer_kernel, num_heads=num_heads,
                             scale=1.0 / math.sqrt(dk), eps=eps)
    resident2d = lambda r, c: pl.BlockSpec((r, c), lambda b: (0, 0))
    return pl.pallas_call(
        kern,
        out_shape=jax.ShapeDtypeStruct((B, S, D), jnp.float32),
        grid=(B,),
        in_specs=[
            pl.BlockSpec((1, S, D), lambda b: (b, 0, 0)),      # x
            resident2d(D, 3 * D),                              # w_qkv (bf16)
            resident2d(1, 3 * D),                              # b_qkv
            resident2d(D, D),                                  # w_o   (bf16)
            resident2d(1, D),                                  # b_o
            pl.BlockSpec((1, S, S), lambda b: (b, 0, 0)),      # additive mask
            resident2d(1, D),                                  # ln1 gamma
            resident2d(1, D),                                  # ln1 beta
            resident2d(D, F),                                  # w1    (bf16)
            resident2d(1, F),                                  # b1
            resident2d(F, D),                                  # w2    (bf16)
            resident2d(1, D),                                  # b2
            resident2d(1, D),                                  # ln2 gamma
            resident2d(1, D),                                  # ln2 beta
        ],
        out_specs=pl.BlockSpec((1, S, D), lambda b: (b, 0, 0)),
        compiler_params=pltpu.CompilerParams(
            dimension_semantics=("parallel",)),
    )(x,
      params["w_qkv"], params["b_qkv"].reshape(1, 3 * D),
      params["w_o"], params["b_o"].reshape(1, D),
      mask_add,
      params["ln1_g"].reshape(1, D), params["ln1_b"].reshape(1, D),
      params["w1"], params["b1"].reshape(1, F),
      params["w2"], params["b2"].reshape(1, D),
      params["ln2_g"].reshape(1, D), params["ln2_b"].reshape(1, D))


# ----------------------------------------------------------------------------
# Deterministic parameter init (MXU weights stored in bf16, rest f32)
# ----------------------------------------------------------------------------
def init_encoder_layer_params(key, d_model, d_ff):
    def nrm(k, shape, scale=0.05):
        return scale * jax.random.normal(k, shape, dtype=jnp.float32)

    ks = jax.random.split(key, 12)
    wq = nrm(ks[0], (d_model, d_model)); bq = nrm(ks[1], (d_model,))
    wk = nrm(ks[2], (d_model, d_model)); bk = nrm(ks[3], (d_model,))
    wv = nrm(ks[4], (d_model, d_model)); bv = nrm(ks[5], (d_model,))
    return {
        # fused QKV weight: (D, 3D)
        "w_qkv": jnp.concatenate([wq, wk, wv], axis=1).astype(jnp.bfloat16),
        "b_qkv": jnp.concatenate([bq, bk, bv], axis=0),
        "w_o": nrm(ks[6], (d_model, d_model)).astype(jnp.bfloat16),
        "b_o": nrm(ks[7], (d_model,)),
        "w1": nrm(ks[8], (d_model, d_ff)).astype(jnp.bfloat16),
        "b1": nrm(ks[9], (d_ff,)),
        "w2": nrm(ks[10], (d_ff, d_model)).astype(jnp.bfloat16),
        "b2": nrm(ks[11], (d_model,)),
        "ln1_g": jnp.ones((d_model,), jnp.float32),
        "ln1_b": jnp.zeros((d_model,), jnp.float32),
        "ln2_g": jnp.ones((d_model,), jnp.float32),
        "ln2_b": jnp.zeros((d_model,), jnp.float32),
    }


# ----------------------------------------------------------------------------
if __name__ == "__main__":
    B = 2
    S = 8
    D_MODEL = 32
    NUM_HEADS = 4
    D_FF = 64
    # dropout=0.1 in the PyTorch module -> identity here (inference semantics)

    key = jax.random.PRNGKey(0)
    k_param, k_x, k_tok = jax.random.split(key, 3)
    params = init_encoder_layer_params(k_param, D_MODEL, D_FF)

    x = jax.random.normal(k_x, (B, S, D_MODEL), dtype=jnp.float32)

    # padding keep-mask over keys -> additive attention mask (0 keep / -1e9 mask)
    tokens = jax.random.randint(k_tok, (B, S), 0, 16, dtype=jnp.int32)
    keep = (tokens != 0)
    mask_add = jnp.where(keep[:, None, :], 0.0, NEG_INF).astype(jnp.float32)
    mask_add = jnp.broadcast_to(mask_add, (B, S, S))

    fwd = jax.jit(functools.partial(encoder_layer, num_heads=NUM_HEADS))
    out = fwd(x, params, mask_add)
    out = jax.block_until_ready(out)

    assert out.shape == (B, S, D_MODEL)
    assert bool(jnp.all(jnp.isfinite(out)))
    print("KERNEL_OK")
</pallas_src>

<mosaic_0001>
module attributes {stable_mosaic.version = 11 : i64} {
  func.func @_encoder_layer_kernel(%arg0: i32, %arg1: memref<1x8x32xf32, #tpu.memory_space<vmem>>, %arg2: memref<32x96xbf16, #tpu.memory_space<vmem>>, %arg3: memref<1x96xf32, #tpu.memory_space<vmem>>, %arg4: memref<32x32xbf16, #tpu.memory_space<vmem>>, %arg5: memref<1x32xf32, #tpu.memory_space<vmem>>, %arg6: memref<1x8x8xf32, #tpu.memory_space<vmem>>, %arg7: memref<1x32xf32, #tpu.memory_space<vmem>>, %arg8: memref<1x32xf32, #tpu.memory_space<vmem>>, %arg9: memref<32x64xbf16, #tpu.memory_space<vmem>>, %arg10: memref<1x64xf32, #tpu.memory_space<vmem>>, %arg11: memref<64x32xbf16, #tpu.memory_space<vmem>>, %arg12: memref<1x32xf32, #tpu.memory_space<vmem>>, %arg13: memref<1x32xf32, #tpu.memory_space<vmem>>, %arg14: memref<1x32xf32, #tpu.memory_space<vmem>>, %arg15: memref<1x8x32xf32, #tpu.memory_space<vmem>>) attributes {dimension_semantics = [#tpu.dimension_semantics<parallel>], iteration_bounds = array<i64: 2>, scalar_prefetch = 0 : i64, scratch_operands = 0 : i64, tpu.core_type = #tpu.core_type<tc>, window_params = [{transform_indices = @transform_0, window_bounds = array<i64: 1, 8, 32>}, {pipeline_mode = #tpu.pipeline_mode<synchronous>, transform_indices = @transform_1, window_bounds = array<i64: 32, 96>}, {pipeline_mode = #tpu.pipeline_mode<synchronous>, transform_indices = @transform_2, window_bounds = array<i64: 1, 96>}, {pipeline_mode = #tpu.pipeline_mode<synchronous>, transform_indices = @transform_3, window_bounds = array<i64: 32, 32>}, {pipeline_mode = #tpu.pipeline_mode<synchronous>, transform_indices = @transform_4, window_bounds = array<i64: 1, 32>}, {transform_indices = @transform_5, window_bounds = array<i64: 1, 8, 8>}, {pipeline_mode = #tpu.pipeline_mode<synchronous>, transform_indices = @transform_6, window_bounds = array<i64: 1, 32>}, {pipeline_mode = #tpu.pipeline_mode<synchronous>, transform_indices = @transform_7, window_bounds = array<i64: 1, 32>}, {pipeline_mode = #tpu.pipeline_mode<synchronous>, transform_indices = @transform_8, window_bounds = array<i64: 32, 64>}, {pipeline_mode = #tpu.pipeline_mode<synchronous>, transform_indices = @transform_9, window_bounds = array<i64: 1, 64>}, {pipeline_mode = #tpu.pipeline_mode<synchronous>, transform_indices = @transform_10, window_bounds = array<i64: 64, 32>}, {pipeline_mode = #tpu.pipeline_mode<synchronous>, transform_indices = @transform_11, window_bounds = array<i64: 1, 32>}, {pipeline_mode = #tpu.pipeline_mode<synchronous>, transform_indices = @transform_12, window_bounds = array<i64: 1, 32>}, {pipeline_mode = #tpu.pipeline_mode<synchronous>, transform_indices = @transform_13, window_bounds = array<i64: 1, 32>}, {transform_indices = @transform_14, window_bounds = array<i64: 1, 8, 32>}]} {
    %c0 = arith.constant 0 : index
    %c0_0 = arith.constant 0 : index
    %c0_1 = arith.constant 0 : index
    %0 = vector.load %arg1[%c0, %c0_0, %c0_1] : memref<1x8x32xf32, #tpu.memory_space<vmem>>, vector<1x8x32xf32>
    %1 = vector.shape_cast %0 : vector<1x8x32xf32> to vector<8x32xf32>
    %2 = arith.truncf %1 : vector<8x32xf32> to vector<8x32xbf16>
    %c0_2 = arith.constant 0 : index
    %c0_3 = arith.constant 0 : index
    %3 = vector.load %arg2[%c0_2, %c0_3] : memref<32x96xbf16, #tpu.memory_space<vmem>>, vector<32x96xbf16>
    %cst = arith.constant dense<0.000000e+00> : vector<8x96xf32>
    %4 = tpu.matmul %2, %3, %cst {dimension_numbers = #tpu.dot_dimension_numbers<[1], [0], [0], [1], [0, 0, 1, 1], [], []>} : vector<8x32xbf16>, vector<32x96xbf16>, vector<8x96xf32> -> vector<8x96xf32>
    %c0_4 = arith.constant 0 : index
    %c0_5 = arith.constant 0 : index
    %5 = vector.load %arg3[%c0_4, %c0_5] : memref<1x96xf32, #tpu.memory_space<vmem>>, vector<1x96xf32>
    %6 = vector.broadcast %5 : vector<1x96xf32> to vector<8x96xf32>
    %7 = arith.addf %4, %6 : vector<8x96xf32>
    %c0_6 = arith.constant 0 : index
    %c0_7 = arith.constant 0 : index
    %c0_8 = arith.constant 0 : index
    %8 = vector.load %arg6[%c0_6, %c0_7, %c0_8] : memref<1x8x8xf32, #tpu.memory_space<vmem>>, vector<1x8x8xf32>
    %9 = vector.shape_cast %8 : vector<1x8x8xf32> to vector<8x8xf32>
    %10 = vector.extract_strided_slice %7 {offsets = [0, 0], sizes = [8, 8], strides = [1, 1]} : vector<8x96xf32> to vector<8x8xf32>
    %11 = arith.truncf %10 : vector<8x8xf32> to vector<8x8xbf16>
    %12 = vector.extract_strided_slice %7 {offsets = [0, 32], sizes = [8, 8], strides = [1, 1]} : vector<8x96xf32> to vector<8x8xf32>
    %13 = arith.truncf %12 : vector<8x8xf32> to vector<8x8xbf16>
    %14 = vector.extract_strided_slice %7 {offsets = [0, 64], sizes = [8, 8], strides = [1, 1]} : vector<8x96xf32> to vector<8x8xf32>
    %15 = arith.truncf %14 : vector<8x8xf32> to vector<8x8xbf16>
    %cst_9 = arith.constant dense<0.000000e+00> : vector<8x8xf32>
    %16 = tpu.matmul %11, %13, %cst_9 {dimension_numbers = #tpu.dot_dimension_numbers<[1], [1], [0], [0], [0, 0, 1, 0], [], []>} : vector<8x8xbf16>, vector<8x8xbf16>, vector<8x8xf32> -> vector<8x8xf32>
    %cst_10 = arith.constant 0.353553385 : f32
    %17 = vector.broadcast %cst_10 : f32 to vector<8x8xf32>
    %18 = arith.mulf %16, %17 : vector<8x8xf32>
    %19 = arith.addf %18, %9 : vector<8x8xf32>
    %cst_11 = arith.constant dense<0xFF800000> : vector<8xf32>
    %20 = vector.multi_reduction <maximumf>, %19, %cst_11 [1] : vector<8x8xf32> to vector<8xf32>
    %21 = vector.shape_cast %20 : vector<8xf32> to vector<8x1xf32>
    %22 = vector.broadcast %21 : vector<8x1xf32> to vector<8x8xf32>
    %23 = arith.subf %19, %22 : vector<8x8xf32>
    %24 = math.exp %23 : vector<8x8xf32>
    %cst_12 = arith.constant dense<0.000000e+00> : vector<8xf32>
    %25 = vector.multi_reduction <add>, %24, %cst_12 [1] : vector<8x8xf32> to vector<8xf32>
    %26 = vector.shape_cast %25 : vector<8xf32> to vector<8x1xf32>
    %27 = tpu.reciprocal %26 {approx = true} : vector<8x1xf32> -> vector<8x1xf32>
    %28 = vector.broadcast %27 : vector<8x1xf32> to vector<8x8xf32>
    %29 = arith.mulf %24, %28 : vector<8x8xf32>
    %30 = arith.truncf %29 : vector<8x8xf32> to vector<8x8xbf16>
    %cst_13 = arith.constant dense<0.000000e+00> : vector<8x8xf32>
    %31 = tpu.matmul %30, %15, %cst_13 {dimension_numbers = #tpu.dot_dimension_numbers<[1], [0], [0], [1], [0, 0, 1, 1], [], []>} : vector<8x8xbf16>, vector<8x8xbf16>, vector<8x8xf32> -> vector<8x8xf32>
    %32 = vector.extract_strided_slice %7 {offsets = [0, 8], sizes = [8, 8], strides = [1, 1]} : vector<8x96xf32> to vector<8x8xf32>
    %33 = arith.truncf %32 : vector<8x8xf32> to vector<8x8xbf16>
    %34 = vector.extract_strided_slice %7 {offsets = [0, 40], sizes = [8, 8], strides = [1, 1]} : vector<8x96xf32> to vector<8x8xf32>
    %35 = arith.truncf %34 : vector<8x8xf32> to vector<8x8xbf16>
    %36 = vector.extract_strided_slice %7 {offsets = [0, 72], sizes = [8, 8], strides = [1, 1]} : vector<8x96xf32> to vector<8x8xf32>
    %37 = arith.truncf %36 : vector<8x8xf32> to vector<8x8xbf16>
    %cst_14 = arith.constant dense<0.000000e+00> : vector<8x8xf32>
    %38 = tpu.matmul %33, %35, %cst_14 {dimension_numbers = #tpu.dot_dimension_numbers<[1], [1], [0], [0], [0, 0, 1, 0], [], []>} : vector<8x8xbf16>, vector<8x8xbf16>, vector<8x8xf32> -> vector<8x8xf32>
    %cst_15 = arith.constant 0.353553385 : f32
    %39 = vector.broadcast %cst_15 : f32 to vector<8x8xf32>
    %40 = arith.mulf %38, %39 : vector<8x8xf32>
    %41 = arith.addf %40, %9 : vector<8x8xf32>
    %cst_16 = arith.constant dense<0xFF800000> : vector<8xf32>
    %42 = vector.multi_reduction <maximumf>, %41, %cst_16 [1] : vector<8x8xf32> to vector<8xf32>
    %43 = vector.shape_cast %42 : vector<8xf32> to vector<8x1xf32>
    %44 = vector.broadcast %43 : vector<8x1xf32> to vector<8x8xf32>
    %45 = arith.subf %41, %44 : vector<8x8xf32>
    %46 = math.exp %45 : vector<8x8xf32>
    %cst_17 = arith.constant dense<0.000000e+00> : vector<8xf32>
    %47 = vector.multi_reduction <add>, %46, %cst_17 [1] : vector<8x8xf32> to vector<8xf32>
    %48 = vector.shape_cast %47 : vector<8xf32> to vector<8x1xf32>
    %49 = tpu.reciprocal %48 {approx = true} : vector<8x1xf32> -> vector<8x1xf32>
    %50 = vector.broadcast %49 : vector<8x1xf32> to vector<8x8xf32>
    %51 = arith.mulf %46, %50 : vector<8x8xf32>
    %52 = arith.truncf %51 : vector<8x8xf32> to vector<8x8xbf16>
    %cst_18 = arith.constant dense<0.000000e+00> : vector<8x8xf32>
    %53 = tpu.matmul %52, %37, %cst_18 {dimension_numbers = #tpu.dot_dimension_numbers<[1], [0], [0], [1], [0, 0, 1, 1], [], []>} : vector<8x8xbf16>, vector<8x8xbf16>, vector<8x8xf32> -> vector<8x8xf32>
    %54 = vector.extract_strided_slice %7 {offsets = [0, 16], sizes = [8, 8], strides = [1, 1]} : vector<8x96xf32> to vector<8x8xf32>
    %55 = arith.truncf %54 : vector<8x8xf32> to vector<8x8xbf16>
    %56 = vector.extract_strided_slice %7 {offsets = [0, 48], sizes = [8, 8], strides = [1, 1]} : vector<8x96xf32> to vector<8x8xf32>
    %57 = arith.truncf %56 : vector<8x8xf32> to vector<8x8xbf16>
    %58 = vector.extract_strided_slice %7 {offsets = [0, 80], sizes = [8, 8], strides = [1, 1]} : vector<8x96xf32> to vector<8x8xf32>
    %59 = arith.truncf %58 : vector<8x8xf32> to vector<8x8xbf16>
    %cst_19 = arith.constant dense<0.000000e+00> : vector<8x8xf32>
    %60 = tpu.matmul %55, %57, %cst_19 {dimension_numbers = #tpu.dot_dimension_numbers<[1], [1], [0], [0], [0, 0, 1, 0], [], []>} : vector<8x8xbf16>, vector<8x8xbf16>, vector<8x8xf32> -> vector<8x8xf32>
    %cst_20 = arith.constant 0.353553385 : f32
    %61 = vector.broadcast %cst_20 : f32 to vector<8x8xf32>
    %62 = arith.mulf %60, %61 : vector<8x8xf32>
    %63 = arith.addf %62, %9 : vector<8x8xf32>
    %cst_21 = arith.constant dense<0xFF800000> : vector<8xf32>
    %64 = vector.multi_reduction <maximumf>, %63, %cst_21 [1] : vector<8x8xf32> to vector<8xf32>
    %65 = vector.shape_cast %64 : vector<8xf32> to vector<8x1xf32>
    %66 = vector.broadcast %65 : vector<8x1xf32> to vector<8x8xf32>
    %67 = arith.subf %63, %66 : vector<8x8xf32>
    %68 = math.exp %67 : vector<8x8xf32>
    %cst_22 = arith.constant dense<0.000000e+00> : vector<8xf32>
    %69 = vector.multi_reduction <add>, %68, %cst_22 [1] : vector<8x8xf32> to vector<8xf32>
    %70 = vector.shape_cast %69 : vector<8xf32> to vector<8x1xf32>
    %71 = tpu.reciprocal %70 {approx = true} : vector<8x1xf32> -> vector<8x1xf32>
    %72 = vector.broadcast %71 : vector<8x1xf32> to vector<8x8xf32>
    %73 = arith.mulf %68, %72 : vector<8x8xf32>
    %74 = arith.truncf %73 : vector<8x8xf32> to vector<8x8xbf16>
    %cst_23 = arith.constant dense<0.000000e+00> : vector<8x8xf32>
    %75 = tpu.matmul %74, %59, %cst_23 {dimension_numbers = #tpu.dot_dimension_numbers<[1], [0], [0], [1], [0, 0, 1, 1], [], []>} : vector<8x8xbf16>, vector<8x8xbf16>, vector<8x8xf32> -> vector<8x8xf32>
    %76 = vector.extract_strided_slice %7 {offsets = [0, 24], sizes = [8, 8], strides = [1, 1]} : vector<8x96xf32> to vector<8x8xf32>
    %77 = arith.truncf %76 : vector<8x8xf32> to vector<8x8xbf16>
    %78 = vector.extract_strided_slice %7 {offsets = [0, 56], sizes = [8, 8], strides = [1, 1]} : vector<8x96xf32> to vector<8x8xf32>
    %79 = arith.truncf %78 : vector<8x8xf32> to vector<8x8xbf16>
    %80 = vector.extract_strided_slice %7 {offsets = [0, 88], sizes = [8, 8], strides = [1, 1]} : vector<8x96xf32> to vector<8x8xf32>
    %81 = arith.truncf %80 : vector<8x8xf32> to vector<8x8xbf16>
    %cst_24 = arith.constant dense<0.000000e+00> : vector<8x8xf32>
    %82 = tpu.matmul %77, %79, %cst_24 {dimension_numbers = #tpu.dot_dimension_numbers<[1], [1], [0], [0], [0, 0, 1, 0], [], []>} : vector<8x8xbf16>, vector<8x8xbf16>, vector<8x8xf32> -> vector<8x8xf32>
    %cst_25 = arith.constant 0.353553385 : f32
    %83 = vector.broadcast %cst_25 : f32 to vector<8x8xf32>
    %84 = arith.mulf %82, %83 : vector<8x8xf32>
    %85 = arith.addf %84, %9 : vector<8x8xf32>
    %cst_26 = arith.constant dense<0xFF800000> : vector<8xf32>
    %86 = vector.multi_reduction <maximumf>, %85, %cst_26 [1] : vector<8x8xf32> to vector<8xf32>
    %87 = vector.shape_cast %86 : vector<8xf32> to vector<8x1xf32>
    %88 = vector.broadcast %87 : vector<8x1xf32> to vector<8x8xf32>
    %89 = arith.subf %85, %88 : vector<8x8xf32>
    %90 = math.exp %89 : vector<8x8xf32>
    %cst_27 = arith.constant dense<0.000000e+00> : vector<8xf32>
    %91 = vector.multi_reduction <add>, %90, %cst_27 [1] : vector<8x8xf32> to vector<8xf32>
    %92 = vector.shape_cast %91 : vector<8xf32> to vector<8x1xf32>
    %93 = tpu.reciprocal %92 {approx = true} : vector<8x1xf32> -> vector<8x1xf32>
    %94 = vector.broadcast %93 : vector<8x1xf32> to vector<8x8xf32>
    %95 = arith.mulf %90, %94 : vector<8x8xf32>
    %96 = arith.truncf %95 : vector<8x8xf32> to vector<8x8xbf16>
    %cst_28 = arith.constant dense<0.000000e+00> : vector<8x8xf32>
    %97 = tpu.matmul %96, %81, %cst_28 {dimension_numbers = #tpu.dot_dimension_numbers<[1], [0], [0], [1], [0, 0, 1, 1], [], []>} : vector<8x8xbf16>, vector<8x8xbf16>, vector<8x8xf32> -> vector<8x8xf32>
    %98 = tpu.concatenate %31, %53, %75, %97 in 1 : vector<8x8xf32>, vector<8x8xf32>, vector<8x8xf32>, vector<8x8xf32> -> vector<8x32xf32>
    %99 = arith.truncf %98 : vector<8x32xf32> to vector<8x32xbf16>
    %c0_29 = arith.constant 0 : index
    %c0_30 = arith.constant 0 : index
    %100 = vector.load %arg4[%c0_29, %c0_30] : memref<32x32xbf16, #tpu.memory_space<vmem>>, vector<32x32xbf16>
    %cst_31 = arith.constant dense<0.000000e+00> : vector<8x32xf32>
    %101 = tpu.matmul %99, %100, %cst_31 {dimension_numbers = #tpu.dot_dimension_numbers<[1], [0], [0], [1], [0, 0, 1, 1], [], []>} : vector<8x32xbf16>, vector<32x32xbf16>, vector<8x32xf32> -> vector<8x32xf32>
    %c0_32 = arith.constant 0 : index
    %c0_33 = arith.constant 0 : index
    %102 = vector.load %arg5[%c0_32, %c0_33] : memref<1x32xf32, #tpu.memory_space<vmem>>, vector<1x32xf32>
    %103 = vector.broadcast %102 : vector<1x32xf32> to vector<8x32xf32>
    %104 = arith.addf %101, %103 : vector<8x32xf32>
    %105 = arith.addf %1, %104 : vector<8x32xf32>
    %c0_34 = arith.constant 0 : index
    %c0_35 = arith.constant 0 : index
    %106 = vector.load %arg7[%c0_34, %c0_35] : memref<1x32xf32, #tpu.memory_space<vmem>>, vector<1x32xf32>
    %c0_36 = arith.constant 0 : index
    %c0_37 = arith.constant 0 : index
    %107 = vector.load %arg8[%c0_36, %c0_37] : memref<1x32xf32, #tpu.memory_space<vmem>>, vector<1x32xf32>
    %cst_38 = arith.constant dense<0.000000e+00> : vector<8xf32>
    %108 = vector.multi_reduction <add>, %105, %cst_38 [1] : vector<8x32xf32> to vector<8xf32>
    %109 = vector.shape_cast %108 : vector<8xf32> to vector<8x1xf32>
    %cst_39 = arith.constant 3.200000e+01 : f32
    %110 = vector.broadcast %cst_39 : f32 to vector<8x1xf32>
    %111 = arith.divf %109, %110 : vector<8x1xf32>
    %112 = vector.broadcast %111 : vector<8x1xf32> to vector<8x32xf32>
    %113 = arith.subf %105, %112 : vector<8x32xf32>
    %114 = arith.mulf %113, %113 : vector<8x32xf32>
    %cst_40 = arith.constant dense<0.000000e+00> : vector<8xf32>
    %115 = vector.multi_reduction <add>, %114, %cst_40 [1] : vector<8x32xf32> to vector<8xf32>
    %116 = vector.shape_cast %115 : vector<8xf32> to vector<8x1xf32>
    %cst_41 = arith.constant 3.200000e+01 : f32
    %117 = vector.broadcast %cst_41 : f32 to vector<8x1xf32>
    %118 = arith.divf %116, %117 : vector<8x1xf32>
    %119 = vector.broadcast %111 : vector<8x1xf32> to vector<8x32xf32>
    %120 = arith.subf %105, %119 : vector<8x32xf32>
    %cst_42 = arith.constant 9.99999974E-6 : f32
    %121 = vector.broadcast %cst_42 : f32 to vector<8x1xf32>
    %122 = arith.addf %118, %121 : vector<8x1xf32>
    %123 = math.rsqrt %122 : vector<8x1xf32>
    %124 = vector.broadcast %123 : vector<8x1xf32> to vector<8x32xf32>
    %125 = arith.mulf %120, %124 : vector<8x32xf32>
    %126 = vector.broadcast %106 : vector<1x32xf32> to vector<8x32xf32>
    %127 = arith.mulf %125, %126 : vector<8x32xf32>
    %128 = vector.broadcast %107 : vector<1x32xf32> to vector<8x32xf32>
    %129 = arith.addf %127, %128 : vector<8x32xf32>
    %130 = arith.truncf %129 : vector<8x32xf32> to vector<8x32xbf16>
    %c0_43 = arith.constant 0 : index
    %c0_44 = arith.constant 0 : index
    %131 = vector.load %arg9[%c0_43, %c0_44] : memref<32x64xbf16, #tpu.memory_space<vmem>>, vector<32x64xbf16>
    %cst_45 = arith.constant dense<0.000000e+00> : vector<8x64xf32>
    %132 = tpu.matmul %130, %131, %cst_45 {dimension_numbers = #tpu.dot_dimension_numbers<[1], [0], [0], [1], [0, 0, 1, 1], [], []>} : vector<8x32xbf16>, vector<32x64xbf16>, vector<8x64xf32> -> vector<8x64xf32>
    %c0_46 = arith.constant 0 : index
    %c0_47 = arith.constant 0 : index
    %133 = vector.load %arg10[%c0_46, %c0_47] : memref<1x64xf32, #tpu.memory_space<vmem>>, vector<1x64xf32>
    %134 = vector.broadcast %133 : vector<1x64xf32> to vector<8x64xf32>
    %135 = arith.addf %132, %134 : vector<8x64xf32>
    %cst_48 = arith.constant 0.000000e+00 : f32
    %136 = vector.broadcast %cst_48 : f32 to vector<8x64xf32>
    %137 = arith.maximumf %135, %136 : vector<8x64xf32>
    %138 = arith.truncf %137 : vector<8x64xf32> to vector<8x64xbf16>
    %c0_49 = arith.constant 0 : index
    %c0_50 = arith.constant 0 : index
    %139 = vector.load %arg11[%c0_49, %c0_50] : memref<64x32xbf16, #tpu.memory_space<vmem>>, vector<64x32xbf16>
    %cst_51 = arith.constant dense<0.000000e+00> : vector<8x32xf32>
    %140 = tpu.matmul %138, %139, %cst_51 {dimension_numbers = #tpu.dot_dimension_numbers<[1], [0], [0], [1], [0, 0, 1, 1], [], []>} : vector<8x64xbf16>, vector<64x32xbf16>, vector<8x32xf32> -> vector<8x32xf32>
    %c0_52 = arith.constant 0 : index
    %c0_53 = arith.constant 0 : index
    %141 = vector.load %arg12[%c0_52, %c0_53] : memref<1x32xf32, #tpu.memory_space<vmem>>, vector<1x32xf32>
    %142 = vector.broadcast %141 : vector<1x32xf32> to vector<8x32xf32>
    %143 = arith.addf %140, %142 : vector<8x32xf32>
    %144 = arith.addf %129, %143 : vector<8x32xf32>
    %c0_54 = arith.constant 0 : index
    %c0_55 = arith.constant 0 : index
    %145 = vector.load %arg13[%c0_54, %c0_55] : memref<1x32xf32, #tpu.memory_space<vmem>>, vector<1x32xf32>
    %c0_56 = arith.constant 0 : index
    %c0_57 = arith.constant 0 : index
    %146 = vector.load %arg14[%c0_56, %c0_57] : memref<1x32xf32, #tpu.memory_space<vmem>>, vector<1x32xf32>
    %cst_58 = arith.constant dense<0.000000e+00> : vector<8xf32>
    %147 = vector.multi_reduction <add>, %144, %cst_58 [1] : vector<8x32xf32> to vector<8xf32>
    %148 = vector.shape_cast %147 : vector<8xf32> to vector<8x1xf32>
    %cst_59 = arith.constant 3.200000e+01 : f32
    %149 = vector.broadcast %cst_59 : f32 to vector<8x1xf32>
    %150 = arith.divf %148, %149 : vector<8x1xf32>
    %151 = vector.broadcast %150 : vector<8x1xf32> to vector<8x32xf32>
    %152 = arith.subf %144, %151 : vector<8x32xf32>
    %153 = arith.mulf %152, %152 : vector<8x32xf32>
    %cst_60 = arith.constant dense<0.000000e+00> : vector<8xf32>
    %154 = vector.multi_reduction <add>, %153, %cst_60 [1] : vector<8x32xf32> to vector<8xf32>
    %155 = vector.shape_cast %154 : vector<8xf32> to vector<8x1xf32>
    %cst_61 = arith.constant 3.200000e+01 : f32
    %156 = vector.broadcast %cst_61 : f32 to vector<8x1xf32>
    %157 = arith.divf %155, %156 : vector<8x1xf32>
    %158 = vector.broadcast %150 : vector<8x1xf32> to vector<8x32xf32>
    %159 = arith.subf %144, %158 : vector<8x32xf32>
    %cst_62 = arith.constant 9.99999974E-6 : f32
    %160 = vector.broadcast %cst_62 : f32 to vector<8x1xf32>
    %161 = arith.addf %157, %160 : vector<8x1xf32>
    %162 = math.rsqrt %161 : vector<8x1xf32>
    %163 = vector.broadcast %162 : vector<8x1xf32> to vector<8x32xf32>
    %164 = arith.mulf %159, %163 : vector<8x32xf32>
    %165 = vector.broadcast %145 : vector<1x32xf32> to vector<8x32xf32>
    %166 = arith.mulf %164, %165 : vector<8x32xf32>
    %167 = vector.broadcast %146 : vector<1x32xf32> to vector<8x32xf32>
    %168 = arith.addf %166, %167 : vector<8x32xf32>
    %c0_63 = arith.constant 0 : index
    %c0_64 = arith.constant 0 : index
    %c0_65 = arith.constant 0 : index
    %169 = vector.load %arg15[%c0_63, %c0_64, %c0_65] : memref<1x8x32xf32, #tpu.memory_space<vmem>>, vector<1x8x32xf32>
    %170 = vector.shape_cast %169 : vector<1x8x32xf32> to vector<8x32xf32>
    %171 = vector.shape_cast %168 : vector<8x32xf32> to vector<1x8x32xf32>
    tpu.vector_store %arg15[%c0_63, %c0_64, %c0_65], %171 {strides = array<i32>} : memref<1x8x32xf32, #tpu.memory_space<vmem>>, vector<1x8x32xf32>,
    return
  }
  func.func @transform_0(%arg0: i32) -> (i32, i32, i32) {
    %c0_i32 = arith.constant 0 : i32
    %c0_i32_0 = arith.constant 0 : i32
    %c0_i32_1 = arith.constant 0 : i32
    return %arg0, %c0_i32, %c0_i32_0 : i32, i32, i32
  }
  func.func @transform_1(%arg0: i32) -> (i32, i32) {
    %c0_i32 = arith.constant 0 : i32
    %c0_i32_0 = arith.constant 0 : i32
    %c0_i32_1 = arith.constant 0 : i32
    return %c0_i32, %c0_i32_0 : i32, i32
  }
  func.func @transform_2(%arg0: i32) -> (i32, i32) {
    %c0_i32 = arith.constant 0 : i32
    %c0_i32_0 = arith.constant 0 : i32
    %c0_i32_1 = arith.constant 0 : i32
    return %c0_i32, %c0_i32_0 : i32, i32
  }
  func.func @transform_3(%arg0: i32) -> (i32, i32) {
    %c0_i32 = arith.constant 0 : i32
    %c0_i32_0 = arith.constant 0 : i32
    %c0_i32_1 = arith.constant 0 : i32
    return %c0_i32, %c0_i32_0 : i32, i32
  }
  func.func @transform_4(%arg0: i32) -> (i32, i32) {
    %c0_i32 = arith.constant 0 : i32
    %c0_i32_0 = arith.constant 0 : i32
    %c0_i32_1 = arith.constant 0 : i32
    return %c0_i32, %c0_i32_0 : i32, i32
  }
  func.func @transform_5(%arg0: i32) -> (i32, i32, i32) {
    %c0_i32 = arith.constant 0 : i32
    %c0_i32_0 = arith.constant 0 : i32
    %c0_i32_1 = arith.constant 0 : i32
    return %arg0, %c0_i32, %c0_i32_0 : i32, i32, i32
  }
  func.func @transform_6(%arg0: i32) -> (i32, i32) {
    %c0_i32 = arith.constant 0 : i32
    %c0_i32_0 = arith.constant 0 : i32
    %c0_i32_1 = arith.constant 0 : i32
    return %c0_i32, %c0_i32_0 : i32, i32
  }
  func.func @transform_7(%arg0: i32) -> (i32, i32) {
    %c0_i32 = arith.constant 0 : i32
    %c0_i32_0 = arith.constant 0 : i32
    %c0_i32_1 = arith.constant 0 : i32
    return %c0_i32, %c0_i32_0 : i32, i32
  }
  func.func @transform_8(%arg0: i32) -> (i32, i32) {
    %c0_i32 = arith.constant 0 : i32
    %c0_i32_0 = arith.constant 0 : i32
    %c0_i32_1 = arith.constant 0 : i32
    return %c0_i32, %c0_i32_0 : i32, i32
  }
  func.func @transform_9(%arg0: i32) -> (i32, i32) {
    %c0_i32 = arith.constant 0 : i32
    %c0_i32_0 = arith.constant 0 : i32
    %c0_i32_1 = arith.constant 0 : i32
    return %c0_i32, %c0_i32_0 : i32, i32
  }
  func.func @transform_10(%arg0: i32) -> (i32, i32) {
    %c0_i32 = arith.constant 0 : i32
    %c0_i32_0 = arith.constant 0 : i32
    %c0_i32_1 = arith.constant 0 : i32
    return %c0_i32, %c0_i32_0 : i32, i32
  }
  func.func @transform_11(%arg0: i32) -> (i32, i32) {
    %c0_i32 = arith.constant 0 : i32
    %c0_i32_0 = arith.constant 0 : i32
    %c0_i32_1 = arith.constant 0 : i32
    return %c0_i32, %c0_i32_0 : i32, i32
  }
  func.func @transform_12(%arg0: i32) -> (i32, i32) {
    %c0_i32 = arith.constant 0 : i32
    %c0_i32_0 = arith.constant 0 : i32
    %c0_i32_1 = arith.constant 0 : i32
    return %c0_i32, %c0_i32_0 : i32, i32
  }
  func.func @transform_13(%arg0: i32) -> (i32, i32) {
    %c0_i32 = arith.constant 0 : i32
    %c0_i32_0 = arith.constant 0 : i32
    %c0_i32_1 = arith.constant 0 : i32
    return %c0_i32, %c0_i32_0 : i32, i32
  }
  func.func @transform_14(%arg0: i32) -> (i32, i32, i32) {
    %c0_i32 = arith.constant 0 : i32
    %c0_i32_0 = arith.constant 0 : i32
    %c0_i32_1 = arith.constant 0 : i32
    return %arg0, %c0_i32, %c0_i32_0 : i32, i32, i32
  }
}

</mosaic_0001>

<llo_original>
// kernel: encoder_layer.1
$region0: #{encoder_layer.1}
  #allocation0 [shape = 'u32[]', space=smem, size = 0x4, offset = 0x4, fixed_abs, tag = 'smem constant byte address 0x4 - core index']
  #allocation1 [shape = 'u32[72,128]{1,0:T(1,128)}', space=vmem, size = 0x9000, scoped, tag = 'internal scratch']
  %s0 = inlined_call_operand.vmem [shape: f32[2,8,32], index: 0, kind: input, shape index: {}]
  %s1 = inlined_call_operand.vmem [shape: bf16[32,96], index: 1, kind: input, shape index: {}]
  %s2 = inlined_call_operand.vmem [shape: f32[1,96], index: 2, kind: input, shape index: {}]
  %s3 = inlined_call_operand.vmem [shape: bf16[32,32], index: 3, kind: input, shape index: {}]
  %s4 = inlined_call_operand.hbm [shape: f32[1,32], index: 4, kind: input, shape index: {}]
  %s5 = inlined_call_operand.hbm [shape: f32[2,8,8], index: 5, kind: input, shape index: {}]
  %s6 = inlined_call_operand.hbm [shape: f32[1,32], index: 6, kind: input, shape index: {}]
  %s7 = inlined_call_operand.hbm [shape: f32[1,32], index: 7, kind: input, shape index: {}]
  %s8 = inlined_call_operand.hbm [shape: bf16[32,64], index: 8, kind: input, shape index: {}]
  %s9 = inlined_call_operand.hbm [shape: f32[1,64], index: 9, kind: input, shape index: {}]
  %s10 = inlined_call_operand.vmem [shape: bf16[64,32], index: 10, kind: input, shape index: {}]
  %s11 = inlined_call_operand.hbm [shape: f32[1,32], index: 11, kind: input, shape index: {}]
  %s12 = inlined_call_operand.hbm [shape: f32[1,32], index: 12, kind: input, shape index: {}]
  %s13 = inlined_call_operand.hbm [shape: f32[1,32], index: 13, kind: input, shape index: {}]
  %s14 = inlined_call_operand.hbm [shape: f32[2,8,32], index: 14, kind: output, shape index: {}]
  %s15 = sld [smem:[#allocation0]]
  $region125: #{encoder_layer.1} parent=0
    _
  %s17 = ssub.s32 1, %s15
  %s18 = scalar_select 0, %s17, %s15
  $region1: #{encoder_layer.1} parent=0
    #allocation2 [shape = 'u8[512]{0}', space=vmem, size = 0x400, scoped, tag = 'input window, operand 4, single buffered']
    #allocation3 [shape = 's32[2]{0}', space=sflag, size = 0x8, scoped, tag = 'scoped memory for encoder_layer.1']
    #allocation4 [shape = 's32[2]{0}', space=sflag, size = 0x8, scoped, tag = 'scoped memory for encoder_layer.1']
    #allocation5 [shape = 'u8[8192]{0}', space=vmem, size = 0x2000, scoped, tag = 'input window, operand 5']
    #allocation6 [shape = 's32[2]{0}', space=sflag, size = 0x8, scoped, tag = 'scoped memory for encoder_layer.1']
    #allocation7 [shape = 'u8[512]{0}', space=vmem, size = 0x400, scoped, tag = 'input window, operand 6, single buffered']
    #allocation8 [shape = 'u8[512]{0}', space=vmem, size = 0x400, scoped, tag = 'input window, operand 7, single buffered']
    #allocation9 [shape = 's32[1]{0}', space=sflag, size = 0x4, scoped, tag = 'scoped memory for encoder_layer.1']
    #allocation10 [shape = 'u8[8192]{0}', space=vmem, size = 0x2000, scoped, tag = 'input window, operand 8, single buffered']
    #allocation11 [shape = 'u8[512]{0}', space=vmem, size = 0x400, scoped, tag = 'input window, operand 9, single buffered']
    #allocation12 [shape = 's32[1]{0}', space=sflag, size = 0x4, scoped, tag = 'scoped memory for encoder_layer.1']
    #allocation13 [shape = 'u8[512]{0}', space=vmem, size = 0x400, scoped, tag = 'input window, operand 11, single buffered']
    #allocation14 [shape = 'u8[512]{0}', space=vmem, size = 0x400, scoped, tag = 'input window, operand 12, single buffered']
    #allocation15 [shape = 's32[1]{0}', space=sflag, size = 0x4, scoped, tag = 'scoped memory for encoder_layer.1']
    #allocation16 [shape = 'u8[512]{0}', space=vmem, size = 0x400, scoped, tag = 'input window, operand 13, single buffered']
    #allocation17 [shape = 'u8[8192]{0}', space=vmem, size = 0x2000, scoped, tag = 'output window, operand 0']
    %19 = vsyncpa [#allocation3], 0
    %20 = vsyncpa [#allocation6], 0
    %s21 = scalar_lea.sflag [#allocation6], 1
    %22 = vsyncpa %s21, 0
    %23 = vsyncpa [#allocation9], 0
    %24 = vsyncpa [#allocation12], 0
    %25 = vsyncpa [#allocation15], 0
    %26 = vsyncpa [#allocation4], 0
    %s27 = scalar_lea.sflag [#allocation4], 1
    %28 = vsyncpa %s27, 0
    loop: start=0, step=1, limit=4
    $region2: #{encoder_layer.1} parent=1 // loop_pre_header
      _
    $region3: #{encoder_layer.1} parent=1 // loop_header
      %s30 = sphi 0, %s34
      %p31 = scmp.ge.s32.totalorder %s30, 4
      %s40 = sphi 0, %s42
      %s43 = sphi 0, %s40
      %s44 = sphi 0, %s43
      %s60 = sphi 0, %s44
      %s64 = sphi 0, %s64
      %s66 = sphi 0, %s64
      %s67 = sphi 0, %s66
      %s81 = sphi 0, %s67
      %s85 = sphi 0, %s85
      %s87 = sphi 0, %s85
      %s88 = sphi 0, %s87
      %s102 = sphi 0, %s88
      %s106 = sphi 0, %s106
      %s108 = sphi 0, %s106
      %s109 = sphi 0, %s108
      %s123 = sphi 0, %s109
      %s127 = sphi 0, %s127
      %s129 = sphi 0, %s127
      %s130 = sphi 0, %s129
      %s144 = sphi 0, %s130
      %s150 = sphi 0, %s152
      %s153 = sphi 0, %s150
      %s154 = sphi 0, %s153
      %s170 = sphi 0, %s154
      %s174 = sphi 0, %s174
      %s176 = sphi 0, %s174
      %s177 = sphi 0, %s176
      %s191 = sphi 0, %s177
      %s195 = sphi 0, %s195
      %s197 = sphi 0, %s195
      %s198 = sphi 0, %s197
      %s212 = sphi 0, %s198
      %s216 = sphi 0, %s216
      %s218 = sphi 0, %s216
      %s219 = sphi 0, %s218
      %s233 = sphi 0, %s219
      %s237 = sphi 0, %s237
      %s239 = sphi 0, %s237
      %s240 = sphi 0, %s239
      %s254 = sphi 0, %s240
      %s258 = sphi 0, %s258
      %s260 = sphi 0, %s258
      %s261 = sphi 0, %s260
      %s275 = sphi 0, %s261
      %s279 = sphi 0, %s279
      %s281 = sphi 0, %s279
      %s282 = sphi 0, %s281
      %s296 = sphi 0, %s282
      %s300 = sphi 0, %s300
      %s302 = sphi 0, %s300
      %s303 = sphi 0, %s302
      %s317 = sphi 0, %s303
      %s321 = sphi 0, %s321
      %s323 = sphi 0, %s321
      %s324 = sphi 0, %s323
      %s338 = sphi 0, %s324
      %s344 = sphi 0, %s346
      %s347 = sphi 0, %s344
      %s348 = sphi 0, %s347
      %s364 = sphi 0, %s348
    $region4: #{encoder_layer.1} parent=1 // loop_header_branch
      %33 = sbr.rel (%p31) target = $region8
    $region5: #{encoder_layer.1} parent=1 // loop_body
      %s35 = ssub.s32 %s30, 1
      %s36 = ssub.s32 %s30, 2
      %s37 = sadd.s32 %s30, 1
      %s38 = ssub.s32 %s30, %s37
      %p39 = scmp.eq.s32.totalorder %s38, 0
      %s41 = sadd.s32 %s40, 1
      %s42 = scalar_select %p39, %s40, %s41
      %p45 = pneg %p39
      %p46 = scmp.eq.s32.totalorder %s30, 1
      %p47 = por %p45, %p46
      %p48 = scmp.ne.s32.totalorder %s40, %s43
      %p49 = scmp.eq.s32.totalorder %s30, 0
      %p50 = por %p48, %p49
      %p51 = scmp.ne.s32.totalorder %s40, %s43
      %p52 = scmp.eq.s32.totalorder %s35, 1
      %p53 = por %p51, %p52
      %p54 = scmp.ne.s32.totalorder %s43, %s44
      %p55 = scmp.eq.s32.totalorder %s35, 0
      %p56 = por %p54, %p55
      %p57 = scmp.ne.s32.totalorder %s43, %s44
      %p58 = scmp.eq.s32.totalorder %s36, 1
      %p59 = por %p57, %p58
      %p61 = scmp.ne.s32.totalorder %s44, %s60
      %p62 = scmp.eq.s32.totalorder %s36, 0
      %p63 = por %p61, %p62
      %s65 = sadd.s32 %s64, 1
      %p68 = scmp.eq.s32.totalorder %s30, 1
      %p69 = scmp.ne.s32.totalorder %s64, %s66
      %p70 = scmp.eq.s32.totalorder %s30, 0
      %p71 = por %p69, %p70
      %p72 = scmp.ne.s32.totalorder %s64, %s66
      %p73 = scmp.eq.s32.totalorder %s35, 1
      %p74 = por %p72, %p73
      %p75 = scmp.ne.s32.totalorder %s66, %s67
      %p76 = scmp.eq.s32.totalorder %s35, 0
      %p77 = por %p75, %p76
      %p78 = scmp.ne.s32.totalorder %s66, %s67
      %p79 = scmp.eq.s32.totalorder %s36, 1
      %p80 = por %p78, %p79
      %p82 = scmp.ne.s32.totalorder %s67, %s81
      %p83 = scmp.eq.s32.totalorder %s36, 0
      %p84 = por %p82, %p83
      %s86 = sadd.s32 %s85, 1
      %p89 = scmp.eq.s32.totalorder %s30, 1
      %p90 = scmp.ne.s32.totalorder %s85, %s87
      %p91 = scmp.eq.s32.totalorder %s30, 0
      %p92 = por %p90, %p91
      %p93 = scmp.ne.s32.totalorder %s85, %s87
      %p94 = scmp.eq.s32.totalorder %s35, 1
      %p95 = por %p93, %p94
      %p96 = scmp.ne.s32.totalorder %s87, %s88
      %p97 = scmp.eq.s32.totalorder %s35, 0
      %p98 = por %p96, %p97
      %p99 = scmp.ne.s32.totalorder %s87, %s88
      %p100 = scmp.eq.s32.totalorder %s36, 1
      %p101 = por %p99, %p100
      %p103 = scmp.ne.s32.totalorder %s88, %s102
      %p104 = scmp.eq.s32.totalorder %s36, 0
      %p105 = por %p103, %p104
      %s107 = sadd.s32 %s106, 1
      %p110 = scmp.eq.s32.totalorder %s30, 1
      %p111 = scmp.ne.s32.totalorder %s106, %s108
      %p112 = scmp.eq.s32.totalorder %s30, 0
      %p113 = por %p111, %p112
      %p114 = scmp.ne.s32.totalorder %s106, %s108
      %p115 = scmp.eq.s32.totalorder %s35, 1
      %p116 = por %p114, %p115
      %p117 = scmp.ne.s32.totalorder %s108, %s109
      %p118 = scmp.eq.s32.totalorder %s35, 0
      %p119 = por %p117, %p118
      %p120 = scmp.ne.s32.totalorder %s108, %s109
      %p121 = scmp.eq.s32.totalorder %s36, 1
      %p122 = por %p120, %p121
      %p124 = scmp.ne.s32.totalorder %s109, %s123
      %p125 = scmp.eq.s32.totalorder %s36, 0
      %p126 = por %p124, %p125
      %s128 = sadd.s32 %s127, 1
      %p131 = scmp.eq.s32.totalorder %s30, 1
      %p132 = scmp.ne.s32.totalorder %s127, %s129
      %p133 = scmp.eq.s32.totalorder %s30, 0
      %p134 = por %p132, %p133
      %p135 = scmp.ne.s32.totalorder %s127, %s129
      %p136 = scmp.eq.s32.totalorder %s35, 1
      %p137 = por %p135, %p136
      %p138 = scmp.ne.s32.totalorder %s129, %s130
      %p139 = scmp.eq.s32.totalorder %s35, 0
      %p140 = por %p138, %p139
      %p141 = scmp.ne.s32.totalorder %s129, %s130
      %p142 = scmp.eq.s32.totalorder %s36, 1
      %p143 = por %p141, %p142
      %p145 = scmp.ne.s32.totalorder %s130, %s144
      %p146 = scmp.eq.s32.totalorder %s36, 0
      %p147 = por %p145, %p146
      %s148 = ssub.s32 %s30, %s37
      %p149 = scmp.eq.s32.totalorder %s148, 0
      %s151 = sadd.s32 %s150, 1
      %s152 = scalar_select %p149, %s150, %s151
      %p155 = pneg %p149
      %p156 = scmp.eq.s32.totalorder %s30, 1
      %p157 = por %p155, %p156
      %p158 = scmp.ne.s32.totalorder %s150, %s153
      %p159 = scmp.eq.s32.totalorder %s30, 0
      %p160 = por %p158, %p159
      %p161 = scmp.ne.s32.totalorder %s150, %s153
      %p162 = scmp.eq.s32.totalorder %s35, 1
      %p163 = por %p161, %p162
      %p164 = scmp.ne.s32.totalorder %s153, %s154
      %p165 = scmp.eq.s32.totalorder %s35, 0
      %p166 = por %p164, %p165
      %p167 = scmp.ne.s32.totalorder %s153, %s154
      %p168 = scmp.eq.s32.totalorder %s36, 1
      %p169 = por %p167, %p168
      %p171 = scmp.ne.s32.totalorder %s154, %s170
      %p172 = scmp.eq.s32.totalorder %s36, 0
      %p173 = por %p171, %p172
      %s175 = sadd.s32 %s174, 1
      %p178 = scmp.eq.s32.totalorder %s30, 1
      %p179 = scmp.ne.s32.totalorder %s174, %s176
      %p180 = scmp.eq.s32.totalorder %s30, 0
      %p181 = por %p179, %p180
      %p182 = scmp.ne.s32.totalorder %s174, %s176
      %p183 = scmp.eq.s32.totalorder %s35, 1
      %p184 = por %p182, %p183
      %p185 = scmp.ne.s32.totalorder %s176, %s177
      %p186 = scmp.eq.s32.totalorder %s35, 0
      %p187 = por %p185, %p186
      %p188 = scmp.ne.s32.totalorder %s176, %s177
      %p189 = scmp.eq.s32.totalorder %s36, 1
      %p190 = por %p188, %p189
      %p192 = scmp.ne.s32.totalorder %s177, %s191
      %p193 = scmp.eq.s32.totalorder %s36, 0
      %p194 = por %p192, %p193
      %s196 = sadd.s32 %s195, 1
      %p199 = scmp.eq.s32.totalorder %s30, 1
      %p200 = scmp.ne.s32.totalorder %s195, %s197
      %p201 = scmp.eq.s32.totalorder %s30, 0
      %p202 = por %p200, %p201
      %p203 = scmp.ne.s32.totalorder %s195, %s197
      %p204 = scmp.eq.s32.totalorder %s35, 1
      %p205 = por %p203, %p204
      %p206 = scmp.ne.s32.totalorder %s197, %s198
      %p207 = scmp.eq.s32.totalorder %s35, 0
      %p208 = por %p206, %p207
      %p209 = scmp.ne.s32.totalorder %s197, %s198
      %p210 = scmp.eq.s32.totalorder %s36, 1
      %p211 = por %p209, %p210
      %p213 = scmp.ne.s32.totalorder %s198, %s212
      %p214 = scmp.eq.s32.totalorder %s36, 0
      %p215 = por %p213, %p214
      %s217 = sadd.s32 %s216, 1
      %p220 = scmp.eq.s32.totalorder %s30, 1
      %p221 = scmp.ne.s32.totalorder %s216, %s218
      %p222 = scmp.eq.s32.totalorder %s30, 0
      %p223 = por %p221, %p222
      %p224 = scmp.ne.s32.totalorder %s216, %s218
      %p225 = scmp.eq.s32.totalorder %s35, 1
      %p226 = por %p224, %p225
      %p227 = scmp.ne.s32.totalorder %s218, %s219
      %p228 = scmp.eq.s32.totalorder %s35, 0
      %p229 = por %p227, %p228
      %p230 = scmp.ne.s32.totalorder %s218, %s219
      %p231 = scmp.eq.s32.totalorder %s36, 1
      %p232 = por %p230, %p231
      %p234 = scmp.ne.s32.totalorder %s219, %s233
      %p235 = scmp.eq.s32.totalorder %s36, 0
      %p236 = por %p234, %p235
      %s238 = sadd.s32 %s237, 1
      %p241 = scmp.eq.s32.totalorder %s30, 1
      %p242 = scmp.ne.s32.totalorder %s237, %s239
      %p243 = scmp.eq.s32.totalorder %s30, 0
      %p244 = por %p242, %p243
      %p245 = scmp.ne.s32.totalorder %s237, %s239
      %p246 = scmp.eq.s32.totalorder %s35, 1
      %p247 = por %p245, %p246
      %p248 = scmp.ne.s32.totalorder %s239, %s240
      %p249 = scmp.eq.s32.totalorder %s35, 0
      %p250 = por %p248, %p249
      %p251 = scmp.ne.s32.totalorder %s239, %s240
      %p252 = scmp.eq.s32.totalorder %s36, 1
      %p253 = por %p251, %p252
      %p255 = scmp.ne.s32.totalorder %s240, %s254
      %p256 = scmp.eq.s32.totalorder %s36, 0
      %p257 = por %p255, %p256
      %s259 = sadd.s32 %s258, 1
      %p262 = scmp.eq.s32.totalorder %s30, 1
      %p263 = scmp.ne.s32.totalorder %s258, %s260
      %p264 = scmp.eq.s32.totalorder %s30, 0
      %p265 = por %p263, %p264
      %p266 = scmp.ne.s32.totalorder %s258, %s260
      %p267 = scmp.eq.s32.totalorder %s35, 1
      %p268 = por %p266, %p267
      %p269 = scmp.ne.s32.totalorder %s260, %s261
      %p270 = scmp.eq.s32.totalorder %s35, 0
      %p271 = por %p269, %p270
      %p272 = scmp.ne.s32.totalorder %s260, %s261
      %p273 = scmp.eq.s32.totalorder %s36, 1
      %p274 = por %p272, %p273
      %p276 = scmp.ne.s32.totalorder %s261, %s275
      %p277 = scmp.eq.s32.totalorder %s36, 0
      %p278 = por %p276, %p277
      %s280 = sadd.s32 %s279, 1
      %p283 = scmp.eq.s32.totalorder %s30, 1
      %p284 = scmp.ne.s32.totalorder %s279, %s281
      %p285 = scmp.eq.s32.totalorder %s30, 0
      %p286 = por %p284, %p285
      %p287 = scmp.ne.s32.totalorder %s279, %s281
      %p288 = scmp.eq.s32.totalorder %s35, 1
      %p289 = por %p287, %p288
      %p290 = scmp.ne.s32.totalorder %s281, %s282
      %p291 = scmp.eq.s32.totalorder %s35, 0
      %p292 = por %p290, %p291
      %p293 = scmp.ne.s32.totalorder %s281, %s282
      %p294 = scmp.eq.s32.totalorder %s36, 1
      %p295 = por %p293, %p294
      %p297 = scmp.ne.s32.totalorder %s282, %s296
      %p298 = scmp.eq.s32.totalorder %s36, 0
      %p299 = por %p297, %p298
      %s301 = sadd.s32 %s300, 1
      %p304 = scmp.eq.s32.totalorder %s30, 1
      %p305 = scmp.ne.s32.totalorder %s300, %s302
      %p306 = scmp.eq.s32.totalorder %s30, 0
      %p307 = por %p305, %p306
      %p308 = scmp.ne.s32.totalorder %s300, %s302
      %p309 = scmp.eq.s32.totalorder %s35, 1
      %p310 = por %p308, %p309
      %p311 = scmp.ne.s32.totalorder %s302, %s303
      %p312 = scmp.eq.s32.totalorder %s35, 0
      %p313 = por %p311, %p312
      %p314 = scmp.ne.s32.totalorder %s302, %s303
      %p315 = scmp.eq.s32.totalorder %s36, 1
      %p316 = por %p314, %p315
      %p318 = scmp.ne.s32.totalorder %s303, %s317
      %p319 = scmp.eq.s32.totalorder %s36, 0
      %p320 = por %p318, %p319
      %s322 = sadd.s32 %s321, 1
      %p325 = scmp.eq.s32.totalorder %s30, 1
      %p326 = scmp.ne.s32.totalorder %s321, %s323
      %p327 = scmp.eq.s32.totalorder %s30, 0
      %p328 = por %p326, %p327
      %p329 = scmp.ne.s32.totalorder %s321, %s323
      %p330 = scmp.eq.s32.totalorder %s35, 1
      %p331 = por %p329, %p330
      %p332 = scmp.ne.s32.totalorder %s323, %s324
      %p333 = scmp.eq.s32.totalorder %s35, 0
      %p334 = por %p332, %p333
      %p335 = scmp.ne.s32.totalorder %s323, %s324
      %p336 = scmp.eq.s32.totalorder %s36, 1
      %p337 = por %p335, %p336
      %p339 = scmp.ne.s32.totalorder %s324, %s338
      %p340 = scmp.eq.s32.totalorder %s36, 0
      %p341 = por %p339, %p340
      %s342 = ssub.s32 %s30, %s37
      %p343 = scmp.eq.s32.totalorder %s342, 0
      %s345 = sadd.s32 %s344, 1
      %s346 = scalar_select %p343, %s344, %s345
      %p349 = pneg %p343
      %p350 = scmp.eq.s32.totalorder %s30, 1
      %p351 = por %p349, %p350
      %p352 = scmp.ne.s32.totalorder %s344, %s347
      %p353 = scmp.eq.s32.totalorder %s30, 0
      %p354 = por %p352, %p353
      %p355 = scmp.ne.s32.totalorder %s344, %s347
      %p356 = scmp.eq.s32.totalorder %s35, 1
      %p357 = por %p355, %p356
      %p358 = scmp.ne.s32.totalorder %s347, %s348
      %p359 = scmp.eq.s32.totalorder %s35, 0
      %p360 = por %p358, %p359
      %p361 = scmp.ne.s32.totalorder %s347, %s348
      %p362 = scmp.eq.s32.totalorder %s36, 1
      %p363 = por %p361, %p362
      %p365 = scmp.ne.s32.totalorder %s348, %s364
      %p366 = scmp.eq.s32.totalorder %s36, 0
      %p367 = por %p365, %p366
      %p368 = scmp.le.s32.totalorder 1, %s30
      %p369 = scmp.lt.s32.totalorder %s30, 3
      %p370 = pnand %p368, %p369
      %p371 = pneg %p370
      // Predicated region
      $region9: #{encoder_layer.1} parent=5 // pred_check
        _
      $region10: #{encoder_layer.1} parent=5 // pred_check_branch
        %373 = sbr.rel (%p370) target = $region12
      $region11: #{encoder_layer.1} parent=5 // pred_region
        %s374 = ssub.s32 %s30, 1
        // Predicated region
        $region13: #{encoder_layer.1} parent=11 // pred_check
          %p375 = pneg %p77
        $region14: #{encoder_layer.1} parent=11 // pred_check_branch
          %377 = sbr.rel (%p375) target = $region16
        $region15: #{encoder_layer.1} parent=11 // pred_region
          _
        $region16: #{encoder_layer.1} parent=11 // pred_fallthru
          _
        // Predicated region
        $region17: #{encoder_layer.1} parent=11 // pred_check
          %p378 = pneg %p98
        $region18: #{encoder_layer.1} parent=11 // pred_check_branch
          %380 = sbr.rel (%p378) target = $region20
        $region19: #{encoder_layer.1} parent=11 // pred_region
          _
        $region20: #{encoder_layer.1} parent=11 // pred_fallthru
          _
        // Predicated region
        $region21: #{encoder_layer.1} parent=11 // pred_check
          %p381 = pneg %p119
        $region22: #{encoder_layer.1} parent=11 // pred_check_branch
          %383 = sbr.rel (%p381) target = $region24
        $region23: #{encoder_layer.1} parent=11 // pred_region
          _
        $region24: #{encoder_layer.1} parent=11 // pred_fallthru
          _
        // Predicated region
        $region25: #{encoder_layer.1} parent=11 // pred_check
          %p384 = pneg %p140
        $region26: #{encoder_layer.1} parent=11 // pred_check_branch
          %386 = sbr.rel (%p384) target = $region28
        $region27: #{encoder_layer.1} parent=11 // pred_region
          %388 = vsyncadd [#allocation3], 0
          %s390 = sshll.u32 %s4, 4
          %s391 = int_to_ptr.hbm [resolvable:$true] %s390
          %s392 = sshll.u32 [#allocation2], 4
          %s393 = int_to_ptr.vmem [resolvable:$true] %s392
          %395 = dma.hbm_to_vmem [thread:$0]  %s391, 16, %s393, [#allocation3]
        $region28: #{encoder_layer.1} parent=11 // pred_fallthru
          _
        // Predicated region
        $region29: #{encoder_layer.1} parent=11 // pred_check
          %p396 = pneg %p187
        $region30: #{encoder_layer.1} parent=11 // pred_check_branch
          %398 = sbr.rel (%p396) target = $region32
        $region31: #{encoder_layer.1} parent=11 // pred_region
          %400 = vsyncadd [#allocation6], 0
          %s402 = sshll.u32 %s6, 4
          %s403 = int_to_ptr.hbm [resolvable:$true] %s402
          %s404 = sshll.u32 [#allocation7], 4
          %s405 = int_to_ptr.vmem [resolvable:$true] %s404
          %407 = dma.hbm_to_vmem [thread:$0]  %s403, 16, %s405, [#allocation6]
        $region32: #{encoder_layer.1} parent=11 // pred_fallthru
          _
        // Predicated region
        $region33: #{encoder_layer.1} parent=11 // pred_check
          %p408 = pneg %p208
        $region34: #{encoder_layer.1} parent=11 // pred_check_branch
          %410 = sbr.rel (%p408) target = $region36
        $region35: #{encoder_layer.1} parent=11 // pred_region
          %412 = vsyncadd [#allocation9], 0
          %s414 = sshll.u32 %s7, 4
          %s415 = int_to_ptr.hbm [resolvable:$true] %s414
          %s416 = sshll.u32 [#allocation8], 4
          %s417 = int_to_ptr.vmem [resolvable:$true] %s416
          %419 = dma.hbm_to_vmem [thread:$0]  %s415, 16, %s417, [#allocation9]
        $region36: #{encoder_layer.1} parent=11 // pred_fallthru
          _
        // Predicated region
        $region37: #{encoder_layer.1} parent=11 // pred_check
          %p420 = pneg %p229
        $region38: #{encoder_layer.1} parent=11 // pred_check_branch
          %422 = sbr.rel (%p420) target = $region40
        $region39: #{encoder_layer.1} parent=11 // pred_region
          %424 = vsyncadd [#allocation9], 0
          %s425 = sshll.u32 %s8, 4
          %s426 = int_to_ptr.hbm [resolvable:$true] %s425
          %s427 = sshll.u32 [#allocation10], 4
          %s428 = int_to_ptr.vmem [resolvable:$true] %s427
          %433 = dma.hbm_to_vmem [thread:$0]  %s426, 256, %s428, [#allocation9], 64, 64, 4
        $region40: #{encoder_layer.1} parent=11 // pred_fallthru
          _
        // Predicated region
        $region41: #{encoder_layer.1} parent=11 // pred_check
          %p434 = pneg %p250
        $region42: #{encoder_layer.1} parent=11 // pred_check_branch
          %436 = sbr.rel (%p434) target = $region44
        $region43: #{encoder_layer.1} parent=11 // pred_region
          %438 = vsyncadd [#allocation12], 0
          %s440 = sshll.u32 %s9, 4
          %s441 = int_to_ptr.hbm [resolvable:$true] %s440
          %s442 = sshll.u32 [#allocation11], 4
          %s443 = int_to_ptr.vmem [resolvable:$true] %s442
          %445 = dma.hbm_to_vmem [thread:$0]  %s441, 16, %s443, [#allocation12]
        $region44: #{encoder_layer.1} parent=11 // pred_fallthru
          _
        // Predicated region
        $region45: #{encoder_layer.1} parent=11 // pred_check
          %p446 = pneg %p271
        $region46: #{encoder_layer.1} parent=11 // pred_check_branch
          %448 = sbr.rel (%p446) target = $region48
        $region47: #{encoder_layer.1} parent=11 // pred_region
          _
        $region48: #{encoder_layer.1} parent=11 // pred_fallthru
          _
        // Predicated region
        $region49: #{encoder_layer.1} parent=11 // pred_check
          %p449 = pneg %p292
        $region50: #{encoder_layer.1} parent=11 // pred_check_branch
          %451 = sbr.rel (%p449) target = $region52
        $region51: #{encoder_layer.1} parent=11 // pred_region
          %453 = vsyncadd [#allocation12], 0
          %s455 = sshll.u32 %s11, 4
          %s456 = int_to_ptr.hbm [resolvable:$true] %s455
          %s457 = sshll.u32 [#allocation13], 4
          %s458 = int_to_ptr.vmem [resolvable:$true] %s457
          %460 = dma.hbm_to_vmem [thread:$0]  %s456, 16, %s458, [#allocation12]
        $region52: #{encoder_layer.1} parent=11 // pred_fallthru
          _
        // Predicated region
        $region53: #{encoder_layer.1} parent=11 // pred_check
          %p461 = pneg %p313
        $region54: #{encoder_layer.1} parent=11 // pred_check_branch
          %463 = sbr.rel (%p461) target = $region56
        $region55: #{encoder_layer.1} parent=11 // pred_region
          %465 = vsyncadd [#allocation15], 0
          %s467 = sshll.u32 %s12, 4
          %s468 = int_to_ptr.hbm [resolvable:$true] %s467
          %s469 = sshll.u32 [#allocation14], 4
          %s470 = int_to_ptr.vmem [resolvable:$true] %s469
          %472 = dma.hbm_to_vmem [thread:$0]  %s468, 16, %s470, [#allocation15]
        $region56: #{encoder_layer.1} parent=11 // pred_fallthru
          _
        // Predicated region
        $region57: #{encoder_layer.1} parent=11 // pred_check
          %p473 = pneg %p334
        $region58: #{encoder_layer.1} parent=11 // pred_check_branch
          %475 = sbr.rel (%p473) target = $region60
        $region59: #{encoder_layer.1} parent=11 // pred_region
          %477 = vsyncadd [#allocation15], 0
          %s479 = sshll.u32 %s13, 4
          %s480 = int_to_ptr.hbm [resolvable:$true] %s479
          %s481 = sshll.u32 [#allocation16], 4
          %s482 = int_to_ptr.vmem [resolvable:$true] %s481
          %484 = dma.hbm_to_vmem [thread:$0]  %s480, 16, %s482, [#allocation15]
        $region60: #{encoder_layer.1} parent=11 // pred_fallthru
          _
      $region12: #{encoder_layer.1} parent=5 // pred_fallthru
        _
      %p485 = scmp.lt.s32.totalorder %s30, 2
      // Predicated region
      $region61: #{encoder_layer.1} parent=5 // pred_check
        %p486 = pneg %p485
      $region62: #{encoder_layer.1} parent=5 // pred_check_branch
        %488 = sbr.rel (%p486) target = $region64
      $region63: #{encoder_layer.1} parent=5 // pred_region
        // Predicated region
        $region65: #{encoder_layer.1} parent=63 // pred_check
          %p489 = pneg %p50
        $region66: #{encoder_layer.1} parent=63 // pred_check_branch
          %491 = sbr.rel (%p489) target = $region68
        $region67: #{encoder_layer.1} parent=63 // pred_region
          %p492 = scmp.lt.s32.totalorder %s30, 1
          %s493 = scalar_select %p492, %s30, 1
          %s494 = smul.addr %s493, 8
          %s495 = scalar_lea.vmem %s0, %s494
        $region68: #{encoder_layer.1} parent=63 // pred_fallthru
          _
        // Predicated region
        $region69: #{encoder_layer.1} parent=63 // pred_check
          %p496 = pneg %p160
        $region70: #{encoder_layer.1} parent=63 // pred_check_branch
          %498 = sbr.rel (%p496) target = $region72
        $region71: #{encoder_layer.1} parent=63 // pred_region
          %s499 = sand.u32 %s30, 1
          %s500 = scalar_lea.sflag [#allocation6], %s499
          %s501 = sand.u32 %s150, 1
          %s502 = smul.addr %s501, 8
          %s503 = scalar_lea.vmem [#allocation5], %s502
          %505 = vsyncadd %s500, 0
          %s506 = smul.addr %s30, 8
          %s507 = scalar_lea.hbm %s5, %s506
          %s509 = sshll.u32 %s507, 4
          %s510 = int_to_ptr.hbm [resolvable:$true] %s509
          %s511 = sshll.u32 %s503, 4
          %s512 = int_to_ptr.vmem [resolvable:$true] %s511
          %514 = dma.hbm_to_vmem [thread:$0]  %s510, 128, %s512, %s500
        $region72: #{encoder_layer.1} parent=63 // pred_fallthru
          _
      $region64: #{encoder_layer.1} parent=5 // pred_fallthru
        _
      %p515 = scmp.le.s32.totalorder 1, %s30
      %p516 = scmp.lt.s32.totalorder %s30, 3
      %p517 = pnand %p515, %p516
      %p518 = pneg %p517
      // Predicated region
      $region73: #{encoder_layer.1} parent=5 // pred_check
        _
      $region74: #{encoder_layer.1} parent=5 // pred_check_branch
        %520 = sbr.rel (%p517) target = $region76
      $region75: #{encoder_layer.1} parent=5 // pred_region
        %s521 = ssub.s32 %s30, 1
        // Predicated region
        $region77: #{encoder_layer.1} parent=75 // pred_check
          %p522 = pneg %p140
        $region78: #{encoder_layer.1} parent=75 // pred_check_branch
          %524 = sbr.rel (%p522) target = $region80
        $region79: #{encoder_layer.1} parent=75 // pred_region
          %526 = dma.done [#allocation3], 16
        $region80: #{encoder_layer.1} parent=75 // pred_fallthru
          _
        %s527 = sand.u32 %s35, 1
        %s528 = scalar_lea.sflag [#allocation6], %s527
        %s529 = sand.u32 %s153, 1
        %s530 = smul.addr %s529, 8
        %s531 = scalar_lea.vmem [#allocation5], %s530
        // Predicated region
        $region81: #{encoder_layer.1} parent=75 // pred_check
          %p532 = pneg %p166
        $region82: #{encoder_layer.1} parent=75 // pred_check_branch
          %534 = sbr.rel (%p532) target = $region84
        $region83: #{encoder_layer.1} parent=75 // pred_region
          %536 = dma.done %s528, 128
        $region84: #{encoder_layer.1} parent=75 // pred_fallthru
          _
        // Predicated region
        $region85: #{encoder_layer.1} parent=75 // pred_check
          %p537 = pneg %p187
        $region86: #{encoder_layer.1} parent=75 // pred_check_branch
          %539 = sbr.rel (%p537) target = $region88
        $region87: #{encoder_layer.1} parent=75 // pred_region
          %541 = dma.done [#allocation6], 16
        $region88: #{encoder_layer.1} parent=75 // pred_fallthru
          _
        // Predicated region
        $region89: #{encoder_layer.1} parent=75 // pred_check
          %p542 = pneg %p208
        $region90: #{encoder_layer.1} parent=75 // pred_check_branch
          %544 = sbr.rel (%p542) target = $region92
        $region91: #{encoder_layer.1} parent=75 // pred_region
          %546 = dma.done [#allocation9], 16
        $region92: #{encoder_layer.1} parent=75 // pred_fallthru
          _
        // Predicated region
        $region93: #{encoder_layer.1} parent=75 // pred_check
          %p547 = pneg %p229
        $region94: #{encoder_layer.1} parent=75 // pred_check_branch
          %549 = sbr.rel (%p547) target = $region96
        $region95: #{encoder_layer.1} parent=75 // pred_region
          %551 = dma.done [#allocation9], 256
        $region96: #{encoder_layer.1} parent=75 // pred_fallthru
          _
        // Predicated region
        $region97: #{encoder_layer.1} parent=75 // pred_check
          %p552 = pneg %p250
        $region98: #{encoder_layer.1} parent=75 // pred_check_branch
          %554 = sbr.rel (%p552) target = $region100
        $region99: #{encoder_layer.1} parent=75 // pred_region
          %556 = dma.done [#allocation12], 16
        $region100: #{encoder_layer.1} parent=75 // pred_fallthru
          _
        // Predicated region
        $region101: #{encoder_layer.1} parent=75 // pred_check
          %p557 = pneg %p292
        $region102: #{encoder_layer.1} parent=75 // pred_check_branch
          %559 = sbr.rel (%p557) target = $region104
        $region103: #{encoder_layer.1} parent=75 // pred_region
          %561 = dma.done [#allocation12], 16
        $region104: #{encoder_layer.1} parent=75 // pred_fallthru
          _
        // Predicated region
        $region105: #{encoder_layer.1} parent=75 // pred_check
          %p562 = pneg %p313
        $region106: #{encoder_layer.1} parent=75 // pred_check_branch
          %564 = sbr.rel (%p562) target = $region108
        $region107: #{encoder_layer.1} parent=75 // pred_region
          %566 = dma.done [#allocation15], 16
        $region108: #{encoder_layer.1} parent=75 // pred_fallthru
          _
        // Predicated region
        $region109: #{encoder_layer.1} parent=75 // pred_check
          %p567 = pneg %p334
        $region110: #{encoder_layer.1} parent=75 // pred_check_branch
          %569 = sbr.rel (%p567) target = $region112
        $region111: #{encoder_layer.1} parent=75 // pred_region
          %571 = dma.done [#allocation15], 16
        $region112: #{encoder_layer.1} parent=75 // pred_fallthru
          _
        %p572 = scmp.lt.s32.totalorder %s35, 1
        %s573 = scalar_select %p572, %s35, 1
        %s574 = smul.addr %s573, 8
        %s575 = scalar_lea.vmem %s0, %s574
        %p576 = pneg %p56
        %p577 = pneg %p53
        %p578 = pneg %p77
        %p579 = pneg %p74
        %p580 = pneg %p98
        %p581 = pneg %p95
        %p582 = pneg %p119
        %p583 = pneg %p116
        %p584 = pneg %p140
        %p585 = pneg %p137
        %s586 = sand.u32 %s35, 1
        %s587 = scalar_lea.sflag [#allocation6], %s586
        %s588 = sand.u32 %s153, 1
        %s589 = smul.addr %s588, 8
        %s590 = scalar_lea.vmem [#allocation5], %s589
        %p591 = pneg %p166
        %p592 = pneg %p163
        %p593 = pneg %p187
        %p594 = pneg %p184
        %p595 = pneg %p208
        %p596 = pneg %p205
        %p597 = pneg %p229
        %p598 = pneg %p226
        %p599 = pneg %p250
        %p600 = pneg %p247
        %p601 = pneg %p271
        %p602 = pneg %p268
        %p603 = pneg %p292
        %p604 = pneg %p289
        %p605 = pneg %p313
        %p606 = pneg %p310
        %p607 = pneg %p334
        %p608 = pneg %p331
        %p609 = pneg %p360
        %p610 = pneg %p357
        %s611 = sand.u32 %s347, 1
        %s612 = scalar_lea.sflag [#allocation4], %s611
        %s613 = sand.u32 %s347, 1
        %s614 = smul.addr %s613, 8
        %s615 = scalar_lea.vmem [#allocation17], %s614
        %p616 = scmp.lt.s32.totalorder %s35, 1
        %s617 = scalar_select %p616, %s35, 1
        %s618 = smul.addr %s617, 8
        %s619 = scalar_lea.vmem %s0, %s618
        %v621 = vld [vmem:[%s619] sm:$0xff]
        %v622 = vpack.c.bf16 %v621, %v621
        %v623 = vld [vmem:[%s1] sm:$0xf]
        %v624 = vld [vmem:[%s1 + $0x4] sm:$0xf]
        %v625 = vld [vmem:[%s1 + $0x8] sm:$0xf]
        %v626 = vld [vmem:[%s1 + $0xc] sm:$0xf]
        %v627 = vld [vmem:[%s2] sm:$0x1]
        %v629 = vperm.slane %v627, 0
        %v635 = vunpack.c.l.b16 %v623
        %v636 = vunpack.c.l.b16 %v624
        %v637 = vunpack.c.l.b16 %v625
        %v638 = vunpack.c.l.b16 %v626
        %v639 = vpack.c.b16 %v636, %v635
        %v640 = vpack.c.b16 %v638, %v637
        %vm643 = vcmask 261120
        %v645 = vsel %vm643, %v622, 0
        %647 = vmatpush.bf16.msra.mxu0 0
        %648 = vmatpush.bf16.msra.mxu0 0
        %649 = vmatpush.bf16.msra.mxu0 0
        %650 = vmatpush.bf16.msra.mxu0 0
        %651 = vmatpush.bf16.msra.mxu0 0
        %652 = vmatpush.bf16.msra.mxu0 0
        %653 = vmatpush.bf16.msra.mxu0 %v640
        %654 = vmatpush.bf16.msra.mxu0 %v639
        %655 = vmatmul.bf16.gmra.mxu0 %v645
        %v656 = vpop.f32.mrf.mxu0
        %v657 = vadd.f32 %v629, %v656
        %v658 = vpop.f32.mrf.mxu0
        %659 = vdwg.mxu0
        %v660 = vld [vmem:[%s531] sm:$0xff]
        %v661 = vpack.c.bf16 %v657, %v657
        %663 = vrot.lane.b32.xlu0 %v661, 96
        %v664 = vpop.permute.xlu0 %663
        %vm665 = vcmask 64512
        %v667 = vsel %vm665, %v661, 0
        %v670 = vsel %vm665, %v664, 0
        %672 = vmatpush.bf16.xpose.msra.mxu0 0
        %673 = vmatpush.bf16.xpose.msra.mxu0 0
        %674 = vmatpush.bf16.xpose.msra.mxu0 0
        %675 = vmatpush.bf16.xpose.msra.mxu0 0
        %676 = vmatpush.bf16.xpose.msra.mxu0 0
        %677 = vmatpush.bf16.xpose.msra.mxu0 0
        %678 = vmatpush.bf16.xpose.msra.mxu0 0
        %679 = vmatpush.bf16.xpose.msra.mxu0 %v670
        %680 = vmatmul.bf16.gmra.mxu0 %v667
        %v681 = vpop.f32.mrf.mxu0
        %v682 = vadd.f32 0.0, %v681
        %v683 = vpop.f32.mrf.mxu0
        %684 = vdwg.mxu0
        %v685 = vmul.f32 %v682, 0.35355338
        %v686 = vadd.f32 %v685, %v660
        %v687 = vsel %vm665, %v686, -inf
        %688 = vmax.xlane.f32.xlu0 %v687
        %v689 = vpop.xlane.xlu0 %688
        %v690 = vsub.f32 %v686, %v689
        %v691 = vmul.f32 %v690, 1.442695
        %v692 = vpow.pop %v691
        %v693 = vsel %vm665, %v692, 0.0
        %694 = vadd.xlane.f32.xlu0 %v693
        %v695 = vpop.xlane.xlu0 %694
        %v696 = vrcp.pop %v695
        %v697 = vmul.f32 %v692, %v696
        %v698 = vpack.c.bf16 %v697, %v697
        %699 = vrot.lane.b32.xlu0 %v661, 64
        %v700 = vpop.permute.xlu0 %699
        %v702 = vsel %vm665, %v698, 0
        %vm704 = vcmask 1043456
        %v706 = vsel %vm704, %v700, 0
        %708 = vmatpush.bf16.msra.mxu0 0
        %709 = vmatpush.bf16.msra.mxu0 0
        %710 = vmatpush.bf16.msra.mxu0 0
        %711 = vmatpush.bf16.msra.mxu0 0
        %712 = vmatpush.bf16.msra.mxu0 0
        %713 = vmatpush.bf16.msra.mxu0 0
        %714 = vmatpush.bf16.msra.mxu0 0
        %715 = vmatpush.bf16.msra.mxu0 %v706
        %716 = vmatmul.bf16.gmra.mxu0 %v702
        %v717 = vpop.f32.mrf.mxu0
        %v718 = vadd.f32 0.0, %v717
        %v719 = vpop.f32.mrf.mxu0
        %720 = vdwg.mxu0
        %721 = vrot.lane.b32.xlu0 %v661, 120
        %v722 = vpop.permute.xlu0 %721
        %723 = vrot.lane.b32.xlu0 %v661, 88
        %v724 = vpop.permute.xlu0 %723
        %v726 = vsel %vm665, %v722, 0
        %v729 = vsel %vm665, %v724, 0
        %731 = vmatpush.bf16.xpose.msra.mxu0 0
        %732 = vmatpush.bf16.xpose.msra.mxu0 0
        %733 = vmatpush.bf16.xpose.msra.mxu0 0
        %734 = vmatpush.bf16.xpose.msra.mxu0 0
        %735 = vmatpush.bf16.xpose.msra.mxu0 0
        %736 = vmatpush.bf16.xpose.msra.mxu0 0
        %737 = vmatpush.bf16.xpose.msra.mxu0 0
        %738 = vmatpush.bf16.xpose.msra.mxu0 %v729
        %739 = vmatmul.bf16.gmra.mxu0 %v726
        %v740 = vpop.f32.mrf.mxu0
        %v741 = vadd.f32 0.0, %v740
        %v742 = vpop.f32.mrf.mxu0
        %743 = vdwg.mxu0
        %v744 = vmul.f32 %v741, 0.35355338
        %v745 = vadd.f32 %v744, %v660
        %v746 = vsel %vm665, %v745, -inf
        %747 = vmax.xlane.f32.xlu0 %v746
        %v748 = vpop.xlane.xlu0 %747
        %v749 = vsub.f32 %v745, %v748
        %v750 = vmul.f32 %v749, 1.442695
        %v751 = vpow.pop %v750
        %v752 = vsel %vm665, %v751, 0.0
        %753 = vadd.xlane.f32.xlu0 %v752
        %v754 = vpop.xlane.xlu0 %753
        %v755 = vrcp.pop %v754
        %v756 = vmul.f32 %v751, %v755
        %v757 = vpack.c.bf16 %v756, %v756
        %758 = vrot.lane.b32.xlu0 %v661, 56
        %v759 = vpop.permute.xlu0 %758
        %v761 = vsel %vm665, %v757, 0
        %v764 = vsel %vm704, %v759, 0
        %766 = vmatpush.bf16.msra.mxu0 0
        %767 = vmatpush.bf16.msra.mxu0 0
        %768 = vmatpush.bf16.msra.mxu0 0
        %769 = vmatpush.bf16.msra.mxu0 0
        %770 = vmatpush.bf16.msra.mxu0 0
        %771 = vmatpush.bf16.msra.mxu0 0
        %772 = vmatpush.bf16.msra.mxu0 0
        %773 = vmatpush.bf16.msra.mxu0 %v764
        %774 = vmatmul.bf16.gmra.mxu0 %v761
        %v775 = vpop.f32.mrf.mxu0
        %v776 = vadd.f32 0.0, %v775
        %v777 = vpop.f32.mrf.mxu0
        %778 = vdwg.mxu0
        %779 = vrot.lane.b32.xlu0 %v661, 112
        %v780 = vpop.permute.xlu0 %779
        %781 = vrot.lane.b32.xlu0 %v661, 80
        %v782 = vpop.permute.xlu0 %781
        %v784 = vsel %vm665, %v780, 0
        %v787 = vsel %vm665, %v782, 0
        %789 = vmatpush.bf16.xpose.msra.mxu0 0
        %790 = vmatpush.bf16.xpose.msra.mxu0 0
        %791 = vmatpush.bf16.xpose.msra.mxu0 0
        %792 = vmatpush.bf16.xpose.msra.mxu0 0
        %793 = vmatpush.bf16.xpose.msra.mxu0 0
        %794 = vmatpush.bf16.xpose.msra.mxu0 0
        %795 = vmatpush.bf16.xpose.msra.mxu0 0
        %796 = vmatpush.bf16.xpose.msra.mxu0 %v787
        %797 = vmatmul.bf16.gmra.mxu0 %v784
        %v798 = vpop.f32.mrf.mxu0
        %v799 = vadd.f32 0.0, %v798
        %v800 = vpop.f32.mrf.mxu0
        %801 = vdwg.mxu0
        %v802 = vmul.f32 %v799, 0.35355338
        %v803 = vadd.f32 %v802, %v660
        %v804 = vsel %vm665, %v803, -inf
        %805 = vmax.xlane.f32.xlu0 %v804
        %v806 = vpop.xlane.xlu0 %805
        %v807 = vsub.f32 %v803, %v806
        %v808 = vmul.f32 %v807, 1.442695
        %v809 = vpow.pop %v808
        %v810 = vsel %vm665, %v809, 0.0
        %811 = vadd.xlane.f32.xlu0 %v810
        %v812 = vpop.xlane.xlu0 %811
        %v813 = vrcp.pop %v812
        %v814 = vmul.f32 %v809, %v813
        %v815 = vpack.c.bf16 %v814, %v814
        %816 = vrot.lane.b32.xlu0 %v661, 48
        %v817 = vpop.permute.xlu0 %816
        %v819 = vsel %vm665, %v815, 0
        %v822 = vsel %vm704, %v817, 0
        %824 = vmatpush.bf16.msra.mxu0 0
        %825 = vmatpush.bf16.msra.mxu0 0
        %826 = vmatpush.bf16.msra.mxu0 0
        %827 = vmatpush.bf16.msra.mxu0 0
        %828 = vmatpush.bf16.msra.mxu0 0
        %829 = vmatpush.bf16.msra.mxu0 0
        %830 = vmatpush.bf16.msra.mxu0 0
        %831 = vmatpush.bf16.msra.mxu0 %v822
        %832 = vmatmul.bf16.gmra.mxu0 %v819
        %v833 = vpop.f32.mrf.mxu0
        %v834 = vadd.f32 0.0, %v833
        %v835 = vpop.f32.mrf.mxu0
        %836 = vdwg.mxu0
        %837 = vrot.lane.b32.xlu0 %v661, 104
        %v838 = vpop.permute.xlu0 %837
        %839 = vrot.lane.b32.xlu0 %v661, 72
        %v840 = vpop.permute.xlu0 %839
        %v842 = vsel %vm665, %v838, 0
        %v845 = vsel %vm665, %v840, 0
        %847 = vmatpush.bf16.xpose.msra.mxu0 0
        %848 = vmatpush.bf16.xpose.msra.mxu0 0
        %849 = vmatpush.bf16.xpose.msra.mxu0 0
        %850 = vmatpush.bf16.xpose.msra.mxu0 0
        %851 = vmatpush.bf16.xpose.msra.mxu0 0
        %852 = vmatpush.bf16.xpose.msra.mxu0 0
        %853 = vmatpush.bf16.xpose.msra.mxu0 0
        %854 = vmatpush.bf16.xpose.msra.mxu0 %v845
        %855 = vmatmul.bf16.gmra.mxu0 %v842
        %v856 = vpop.f32.mrf.mxu0
        %v857 = vadd.f32 0.0, %v856
        %v858 = vpop.f32.mrf.mxu0
        %859 = vdwg.mxu0
        %v860 = vmul.f32 %v857, 0.35355338
        %v861 = vadd.f32 %v860, %v660
        %v862 = vsel %vm665, %v861, -inf
        %863 = vmax.xlane.f32.xlu0 %v862
        %v864 = vpop.xlane.xlu0 %863
        %v865 = vsub.f32 %v861, %v864
        %v866 = vmul.f32 %v865, 1.442695
        %v867 = vpow.pop %v866
        %v868 = vsel %vm665, %v867, 0.0
        %869 = vadd.xlane.f32.xlu0 %v868
        %v870 = vpop.xlane.xlu0 %869
        %v871 = vrcp.pop %v870
        %v872 = vmul.f32 %v867, %v871
        %v873 = vpack.c.bf16 %v872, %v872
        %874 = vrot.lane.b32.xlu0 %v661, 40
        %v875 = vpop.permute.xlu0 %874
        %v877 = vsel %vm665, %v873, 0
        %v880 = vsel %vm704, %v875, 0
        %882 = vmatpush.bf16.msra.mxu0 0
        %883 = vmatpush.bf16.msra.mxu0 0
        %884 = vmatpush.bf16.msra.mxu0 0
        %885 = vmatpush.bf16.msra.mxu0 0
        %886 = vmatpush.bf16.msra.mxu0 0
        %887 = vmatpush.bf16.msra.mxu0 0
        %888 = vmatpush.bf16.msra.mxu0 0
        %889 = vmatpush.bf16.msra.mxu0 %v880
        %890 = vmatmul.bf16.gmra.mxu0 %v877
        %v891 = vpop.f32.mrf.mxu0
        %v892 = vadd.f32 0.0, %v891
        %v893 = vpop.f32.mrf.mxu0
        %894 = vdwg.mxu0
        %896 = vrot.lane.b32.xlu0 %v776, 8
        %v897 = vpop.permute.xlu0 %896
        %900 = vrot.lane.b32.xlu0 %v834, 16
        %v901 = vpop.permute.xlu0 %900
        %904 = vrot.lane.b32.xlu0 %v892, 24
        %v905 = vpop.permute.xlu0 %904
        %v907 = vsel %vm665, %v718, %v897
        %vm908 = vcmask 130048
        %v909 = vsel %vm908, %v907, %v901
        %vm910 = vcmask 195584
        %v911 = vsel %vm910, %v909, %v905
        %v912 = vpack.c.bf16 %v911, %v911
        %v913 = vld [vmem:[%s3] sm:$0xf]
        %v914 = vld [vmem:[%s3 + $0x4] sm:$0xf]
        %v915 = vld [vmem:[%s3 + $0x8] sm:$0xf]
        %v916 = vld [vmem:[%s3 + $0xc] sm:$0xf]
        %v917 = vld [vmem:[#allocation2] sm:$0x1]
        %v919 = vperm.slane %v917, 0
        %v925 = vunpack.c.l.b16 %v913
        %v926 = vunpack.c.l.b16 %v914
        %v927 = vunpack.c.l.b16 %v915
        %v928 = vunpack.c.l.b16 %v916
        %v929 = vpack.c.b16 %v926, %v925
        %v930 = vpack.c.b16 %v928, %v927
        %v934 = vsel %vm643, %v912, 0
        %936 = vmatpush.bf16.msra.mxu0 0
        %937 = vmatpush.bf16.msra.mxu0 0
        %938 = vmatpush.bf16.msra.mxu0 0
        %939 = vmatpush.bf16.msra.mxu0 0
        %940 = vmatpush.bf16.msra.mxu0 0
        %941 = vmatpush.bf16.msra.mxu0 0
        %942 = vmatpush.bf16.msra.mxu0 %v930
        %943 = vmatpush.bf16.msra.mxu0 %v929
        %944 = vmatmul.bf16.gmra.mxu0 %v934
        %v945 = vpop.f32.mrf.mxu0
        %v946 = vadd.f32 %v919, %v945
        %v947 = vpop.f32.mrf.mxu0
        %948 = vdwg.mxu0
        %v949 = vadd.f32 %v621, %v946
        %v950 = vld [vmem:[#allocation7] sm:$0x1]
        %v951 = vld [vmem:[#allocation8] sm:$0x1]
        %v952 = vsel %vm643, %v949, 0.0
        %953 = vadd.xlane.f32.xlu0 %v952
        %v954 = vpop.xlane.xlu0 %953
        %v955 = vrcp.pop 32.0
        %v956 = vmul.f32 32.0, %v955
        %v957 = vsub.f32 1.0, %v956
        %v958 = vmul.f32 %v955, %v957
        %v959 = vadd.f32 %v955, %v958
        %vm960 = vweird.f32 %v955
        %v961 = vsel %vm960, %v955, %v959
        %v962 = vmul.f32 %v954, %v961
        %v963 = vsub.f32 %v949, %v962
        %v964 = vmul.f32 %v963, %v963
        %v965 = vsel %vm643, %v964, 0.0
        %966 = vadd.xlane.f32.xlu0 %v965
        %v967 = vpop.xlane.xlu0 %966
        %v968 = vmul.f32 %v967, %v961
        %v969 = vadd.f32 %v968, 1e-05
        %v970 = vrsqrt.pop %v969
        %v971 = vmul.f32 %v970, %v969
        %v972 = vmul.f32 %v971, %v970
        %v973 = vmul.f32 0.5, %v972
        %v974 = vsub.f32 1.5, %v973
        %v975 = vmul.f32 %v970, %v974
        %vm976 = vweird.f32 %v969
        %vm977 = vweird.f32 %v970
        %vm978 = vmor %vm976, %vm977
        %v979 = vsel %vm978, %v970, %v975
        %v980 = vmul.f32 %v963, %v979
        %v982 = vperm.slane %v950, 0
        %v984 = vmul.f32 %v980, %v982
        %v986 = vperm.slane %v951, 0
        %v988 = vadd.f32 %v984, %v986
        %v989 = vpack.c.bf16 %v988, %v988
        %v990 = vld [vmem:[#allocation10] sm:$0xf]
        %v991 = vld [vmem:[#allocation10 + $0x4] sm:$0xf]
        %v992 = vld [vmem:[#allocation10 + $0x8] sm:$0xf]
        %v993 = vld [vmem:[#allocation10 + $0xc] sm:$0xf]
        %v994 = vld [vmem:[#allocation11] sm:$0x1]
        %v996 = vperm.slane %v994, 0
        %v1002 = vunpack.c.l.b16 %v990
        %v1003 = vunpack.c.l.b16 %v991
        %v1004 = vunpack.c.l.b16 %v992
        %v1005 = vunpack.c.l.b16 %v993
        %v1006 = vpack.c.b16 %v1003, %v1002
        %v1007 = vpack.c.b16 %v1005, %v1004
        %v1011 = vsel %vm643, %v989, 0
        %1013 = vmatpush.bf16.msra.mxu0 0
        %1014 = vmatpush.bf16.msra.mxu0 0
        %1015 = vmatpush.bf16.msra.mxu0 0
        %1016 = vmatpush.bf16.msra.mxu0 0
        %1017 = vmatpush.bf16.msra.mxu0 0
        %1018 = vmatpush.bf16.msra.mxu0 0
        %1019 = vmatpush.bf16.msra.mxu0 %v1007
        %1020 = vmatpush.bf16.msra.mxu0 %v1006
        %1021 = vmatmul.bf16.gmra.mxu0 %v1011
        %v1022 = vpop.f32.mrf.mxu0
        %v1023 = vadd.f32 %v996, %v1022
        %v1024 = vpop.f32.mrf.mxu0
        %1025 = vdwg.mxu0
        %v1026 = vmax.f32 %v1023, 0.0
        %v1027 = vpack.c.bf16 %v1026, %v1026
        %v1028 = vld [vmem:[%s10] sm:$0xf]
        %v1029 = vld [vmem:[%s10 + $0x4] sm:$0xf]
        %v1030 = vld [vmem:[%s10 + $0x8] sm:$0xf]
        %v1031 = vld [vmem:[%s10 + $0xc] sm:$0xf]
        %v1032 = vld [vmem:[%s10 + $0x10] sm:$0xf]
        %v1033 = vld [vmem:[%s10 + $0x14] sm:$0xf]
        %v1034 = vld [vmem:[%s10 + $0x18] sm:$0xf]
        %v1035 = vld [vmem:[%s10 + $0x1c] sm:$0xf]
        %v1036 = vld [vmem:[#allocation13] sm:$0x1]
        %v1038 = vperm.slane %v1036, 0
        %v1048 = vunpack.c.l.b16 %v1028
        %v1049 = vunpack.c.l.b16 %v1029
        %v1050 = vunpack.c.l.b16 %v1030
        %v1051 = vunpack.c.l.b16 %v1031
        %v1052 = vunpack.c.l.b16 %v1032
        %v1053 = vunpack.c.l.b16 %v1033
        %v1054 = vunpack.c.l.b16 %v1034
        %v1055 = vunpack.c.l.b16 %v1035
        %v1056 = vpack.c.b16 %v1049, %v1048
        %v1057 = vpack.c.b16 %v1051, %v1050
        %v1058 = vpack.c.b16 %v1053, %v1052
        %v1059 = vpack.c.b16 %v1055, %v1054
        %vm1064 = vcmask 523264
        %v1066 = vsel %vm1064, %v1027, 0
        %1068 = vmatpush.bf16.msra.mxu0 0
        %1069 = vmatpush.bf16.msra.mxu0 0
        %1070 = vmatpush.bf16.msra.mxu0 0
        %1071 = vmatpush.bf16.msra.mxu0 0
        %1072 = vmatpush.bf16.msra.mxu0 %v1059
        %1073 = vmatpush.bf16.msra.mxu0 %v1058
        %1074 = vmatpush.bf16.msra.mxu0 %v1057
        %1075 = vmatpush.bf16.msra.mxu0 %v1056
        %1076 = vmatmul.bf16.gmra.mxu0 %v1066
        %v1077 = vpop.f32.mrf.mxu0
        %v1078 = vadd.f32 %v1038, %v1077
        %v1079 = vpop.f32.mrf.mxu0
        %1080 = vdwg.mxu0
        %v1081 = vadd.f32 %v988, %v1078
        %v1082 = vld [vmem:[#allocation14] sm:$0x1]
        %v1083 = vld [vmem:[#allocation16] sm:$0x1]
        %v1084 = vsel %vm643, %v1081, 0.0
        %1085 = vadd.xlane.f32.xlu0 %v1084
        %v1086 = vpop.xlane.xlu0 %1085
        %v1087 = vmul.f32 %v1086, %v961
        %v1088 = vsub.f32 %v1081, %v1087
        %v1089 = vmul.f32 %v1088, %v1088
        %v1090 = vsel %vm643, %v1089, 0.0
        %1091 = vadd.xlane.f32.xlu0 %v1090
        %v1092 = vpop.xlane.xlu0 %1091
        %v1093 = vmul.f32 %v1092, %v961
        %v1094 = vadd.f32 %v1093, 1e-05
        %v1095 = vrsqrt.pop %v1094
        %v1096 = vmul.f32 %v1095, %v1094
        %v1097 = vmul.f32 %v1096, %v1095
        %v1098 = vmul.f32 0.5, %v1097
        %v1099 = vsub.f32 1.5, %v1098
        %v1100 = vmul.f32 %v1095, %v1099
        %vm1101 = vweird.f32 %v1094
        %vm1102 = vweird.f32 %v1095
        %vm1103 = vmor %vm1101, %vm1102
        %v1104 = vsel %vm1103, %v1095, %v1100
        %v1105 = vmul.f32 %v1088, %v1104
        %v1107 = vperm.slane %v1082, 0
        %v1109 = vmul.f32 %v1105, %v1107
        %v1111 = vperm.slane %v1083, 0
        %v1113 = vadd.f32 %v1109, %v1111
        %1114 = vst.msk [vmem:[%s615] sm:$0xff] %vm643, %v1113
        %s1115 = sand.u32 %s347, 1
        %s1116 = scalar_lea.sflag [#allocation4], %s1115
        %s1117 = sand.u32 %s347, 1
        %s1118 = smul.addr %s1117, 8
        %s1119 = scalar_lea.vmem [#allocation17], %s1118
        // Predicated region
        $region113: #{encoder_layer.1} parent=75 // pred_check
          %p1120 = pneg %p357
        $region114: #{encoder_layer.1} parent=75 // pred_check_branch
          %1122 = sbr.rel (%p1120) target = $region116
        $region115: #{encoder_layer.1} parent=75 // pred_region
          %1124 = vsyncadd %s1116, 0
          %s1125 = smul.addr %s35, 8
          %s1126 = scalar_lea.hbm %s14, %s1125
          %s1128 = sshll.u32 %s1119, 4
          %s1129 = int_to_ptr.vmem [resolvable:$true] %s1128
          %s1130 = sshll.u32 %s1126, 4
          %s1131 = int_to_ptr.hbm [resolvable:$true] %s1130
          %1133 = dma.vmem_to_hbm [thread:$0]  %s1129, 128, %s1131, %s1116
        $region116: #{encoder_layer.1} parent=75 // pred_fallthru
          _
      $region76: #{encoder_layer.1} parent=5 // pred_fallthru
        _
      %p1134 = scmp.le.s32.totalorder 2, %s30
      // Predicated region
      $region117: #{encoder_layer.1} parent=5 // pred_check
        %p1135 = pneg %p1134
      $region118: #{encoder_layer.1} parent=5 // pred_check_branch
        %1137 = sbr.rel (%p1135) target = $region120
      $region119: #{encoder_layer.1} parent=5 // pred_region
        %s1138 = ssub.s32 %s30, 2
        // Predicated region
        $region121: #{encoder_layer.1} parent=119 // pred_check
          %p1139 = pneg %p363
        $region122: #{encoder_layer.1} parent=119 // pred_check_branch
          %1141 = sbr.rel (%p1139) target = $region124
        $region123: #{encoder_layer.1} parent=119 // pred_region
          %s1142 = sand.u32 %s348, 1
          %s1143 = scalar_lea.sflag [#allocation4], %s1142
          %s1144 = sand.u32 %s348, 1
          %s1145 = smul.addr %s1144, 8
          %s1146 = scalar_lea.vmem [#allocation17], %s1145
          %1148 = dma.done %s1143, 128
        $region124: #{encoder_layer.1} parent=119 // pred_fallthru
          _
      $region120: #{encoder_layer.1} parent=5 // pred_fallthru
        _
    $region6: #{encoder_layer.1} parent=1 // loop_footer
      %s34 = sadd.s32 1, %s30
    $region7: #{encoder_layer.1} parent=1 // loop_footer_branch
      %29 = sbr.rel target = $region3
    $region8: #{encoder_layer.1} parent=1 // loop_exit
      _
    %1149 = vsyncpa [#allocation3], 1
    %s1150 = scalar_lea.sflag [#allocation3], 1
    %1151 = vsyncpa %s1150, 1
    %1152 = vsyncpa [#allocation6], 1
    %s1153 = scalar_lea.sflag [#allocation6], 1
    %1154 = vsyncpa %s1153, 1
    %1155 = vsyncpa [#allocation9], 1
    %1156 = vsyncpa [#allocation12], 1
    %1157 = vsyncpa [#allocation15], 1
    %1158 = vsyncpa [#allocation4], 1
    %s1159 = scalar_lea.sflag [#allocation4], 1
    %1160 = vsyncpa %s1159, 1

</llo_original>
